<compile_context>
chip_gen: v7x
topology: tpu7x:2x2x1
jax: 0.10.0
libtpu: 0.0.40
codegen_flags: <defaults>
</compile_context>

<pallas_src>
import jax
import jax.numpy as jnp
from jax import lax
from jax.experimental import pallas as pl
from jax.experimental.pallas import tpu as pltpu

LAYER_SIZES = [10, 50, 100, 200, 200, 100, 30, 1]  # in/out dims of the 7 Linears


def _net_h_kernel(x_ref,
                  w1, b1, w2, b2, w3, b3, w4, b4, w5, b5, w6, b6,
                  w7c, b7, o_ref):
    """One batch tile of the MLP.  x arrives (TM, 10); batch rides lanes after layer 1."""
    x = x_ref[...]                                            # (TM, 10), MXU dtype

    # Layer 1: contract the feature dim of x in-place (W (50,10) . x (TM,10)^T)
    # -> (50, TM).  NT-form dot keeps batch on the lane axis with no transpose.
    y = lax.dot_general(w1[...], x,
                        dimension_numbers=(((1,), (1,)), ((), ())),
                        preferred_element_type=jnp.float32)
    h = jnp.maximum(y + b1[...], 0.0)                         # (50, TM) f32

    def linear_relu(h, w_ref, b_ref):
        # W (out, in) @ h (in, TM) -> f32 accumulation on the MXU.
        y = jnp.dot(w_ref[...], h.astype(w_ref.dtype),
                    preferred_element_type=jnp.float32)
        return jnp.maximum(y + b_ref[...], 0.0)               # bias + ReLU in f32

    h = linear_relu(h, w2, b2)                                # (100, TM)
    h = linear_relu(h, w3, b3)                                # (200, TM)
    h = linear_relu(h, w4, b4)                                # (200, TM)
    h = linear_relu(h, w5, b5)                                # (100, TM)
    h = linear_relu(h, w6, b6)                                # (30,  TM)

    # Final 30 -> 1: VPU broadcast-multiply + sublane reduction (cheaper than
    # an M=1 MXU matmul); result is already lane-dense (1, TM).
    o_ref[...] = jnp.sum(h * w7c[...], axis=0, keepdims=True) + b7[...]


def _choose_tm(batch, tm):
    """Pick the batch tile: big enough to amortize per-step cost, small enough
    to keep >= 2 grid steps (v7x megacore) when the batch allows it."""
    need = ((max(batch, 1) + 127) // 128) * 128               # lanes, rounded up
    tm = min(tm, need)
    if need >= 256 and tm >= need:                            # would be a 1-step grid
        tm = ((-(-need // 2) + 127) // 128) * 128             # split into >= 2 tiles
    return tm


def net_h_forward(x, params, *, tm=2048, mxu_dtype=jnp.bfloat16):
    """x: (B, 10) float32.  params: list of (W_(out,in) f32, b_(out,) f32)."""
    B = x.shape[0]
    tm = _choose_tm(B, tm)
    grid = pl.cdiv(B, tm)
    b_pad = grid * tm

    # x stays in its natural (B, 10) layout; only pad rows + cast to MXU dtype.
    xq = x.astype(mxu_dtype)
    if b_pad != B:
        # Padded rows evaluate to ReLU(bias) chains inside the kernel and are
        # sliced off below -- never reduce over the padded lanes.
        xq = jnp.pad(xq, ((0, b_pad - B), (0, 0)))

    flat = []
    for i, (w, b) in enumerate(params):
        if i < 6:
            flat.append(w.astype(mxu_dtype))                       # (out, in)
            flat.append(b.reshape(-1, 1).astype(jnp.float32))      # (out, 1)  f32
        else:  # layer 7 runs on the VPU, keep it f32 as a column vector
            flat.append(w.reshape(-1, 1).astype(jnp.float32))      # (30, 1)
            flat.append(b.reshape(1, 1).astype(jnp.float32))       # (1, 1)

    # Weights/biases: full-array blocks, constant index_map -> VMEM-resident
    # across batch tiles (no re-DMA per grid step).
    resident = lambda a: pl.BlockSpec(a.shape, lambda i: (0, 0))

    # Advisory cost estimate for XLA's scheduler around this short kernel.
    macs = sum(LAYER_SIZES[i] * LAYER_SIZES[i + 1] for i in range(7))
    param_bytes = sum(int(a.size) * a.dtype.itemsize for a in flat)
    cost = pl.CostEstimate(
        flops=2 * macs * b_pad,
        transcendentals=0,
        bytes_accessed=b_pad * (10 * xq.dtype.itemsize + 4) + param_bytes)

    out = pl.pallas_call(
        _net_h_kernel,
        out_shape=jax.ShapeDtypeStruct((1, b_pad), jnp.float32),
        grid=(grid,),
        in_specs=[pl.BlockSpec((tm, 10), lambda i: (i, 0))]        # streamed x tile
                 + [resident(a) for a in flat],
        out_specs=pl.BlockSpec((1, tm), lambda i: (0, i)),         # lane-dense output
        compiler_params=pltpu.CompilerParams(
            dimension_semantics=("parallel",),                     # megacore on v7x
            vmem_limit_bytes=(32 << 20) if tm >= 4096 else (16 << 20)),
        cost_estimate=cost,
    )(xq, *flat)

    return out[0, :B].reshape(B, 1)                                # back to (B, 1)


def init_params(key):
    """PyTorch nn.Linear default init: U(-1/sqrt(fan_in), 1/sqrt(fan_in))."""
    params = []
    for i in range(len(LAYER_SIZES) - 1):
        fan_in, fan_out = LAYER_SIZES[i], LAYER_SIZES[i + 1]
        key, kw, kb = jax.random.split(key, 3)
        bound = 1.0 / (fan_in ** 0.5)
        w = jax.random.uniform(kw, (fan_out, fan_in), jnp.float32, -bound, bound)
        b = jax.random.uniform(kb, (fan_out,), jnp.float32, -bound, bound)
        params.append((w, b))
    return params


def net_h_reference(x, params):
    """Pure-JAX f32 reference (PyTorch semantics: h @ W.T + b)."""
    h = x
    for i, (w, b) in enumerate(params):
        h = h @ w.T + b
        if i < len(params) - 1:
            h = jnp.maximum(h, 0.0)
    return h


if __name__ == "__main__":
    key = jax.random.PRNGKey(0)
    kx, kp = jax.random.split(key)

    batch = 8
    x = jax.random.normal(kx, (batch, 10), jnp.float32)
    params = init_params(kp)

    out = jax.block_until_ready(net_h_forward(x, params))
    ref = net_h_reference(x, params)

    assert out.shape == (batch, 1), out.shape
    # bf16 MXU operands (f32 accumulation) -> compare against the f32 reference
    # with a loosened tolerance.  Use mxu_dtype=jnp.float32 for tighter accuracy.
    assert jnp.allclose(out, ref, atol=5e-2, rtol=5e-2), (out, ref)

    print("KERNEL_OK")
</pallas_src>

<mosaic_0001>
module attributes {stable_mosaic.version = 11 : i64} {
  func.func @_net_h_kernel(%arg0: i32, %arg1: memref<128x10xbf16, #tpu.memory_space<vmem>>, %arg2: memref<50x10xbf16, #tpu.memory_space<vmem>>, %arg3: memref<50x1xf32, #tpu.memory_space<vmem>>, %arg4: memref<100x50xbf16, #tpu.memory_space<vmem>>, %arg5: memref<100x1xf32, #tpu.memory_space<vmem>>, %arg6: memref<200x100xbf16, #tpu.memory_space<vmem>>, %arg7: memref<200x1xf32, #tpu.memory_space<vmem>>, %arg8: memref<200x200xbf16, #tpu.memory_space<vmem>>, %arg9: memref<200x1xf32, #tpu.memory_space<vmem>>, %arg10: memref<100x200xbf16, #tpu.memory_space<vmem>>, %arg11: memref<100x1xf32, #tpu.memory_space<vmem>>, %arg12: memref<30x100xbf16, #tpu.memory_space<vmem>>, %arg13: memref<30x1xf32, #tpu.memory_space<vmem>>, %arg14: memref<30x1xf32, #tpu.memory_space<vmem>>, %arg15: memref<1x1xf32, #tpu.memory_space<vmem>>, %arg16: memref<1x128xf32, #tpu.memory_space<vmem>>) attributes {dimension_semantics = [#tpu.dimension_semantics<parallel>], iteration_bounds = array<i64: 1>, scalar_prefetch = 0 : i64, scratch_operands = 0 : i64, tpu.core_type = #tpu.core_type<tc>, window_params = [{transform_indices = @transform_0, window_bounds = array<i64: 128, 10>}, {pipeline_mode = #tpu.pipeline_mode<synchronous>, transform_indices = @transform_1, window_bounds = array<i64: 50, 10>}, {pipeline_mode = #tpu.pipeline_mode<synchronous>, transform_indices = @transform_2, window_bounds = array<i64: 50, 1>}, {pipeline_mode = #tpu.pipeline_mode<synchronous>, transform_indices = @transform_3, window_bounds = array<i64: 100, 50>}, {pipeline_mode = #tpu.pipeline_mode<synchronous>, transform_indices = @transform_4, window_bounds = array<i64: 100, 1>}, {pipeline_mode = #tpu.pipeline_mode<synchronous>, transform_indices = @transform_5, window_bounds = array<i64: 200, 100>}, {pipeline_mode = #tpu.pipeline_mode<synchronous>, transform_indices = @transform_6, window_bounds = array<i64: 200, 1>}, {pipeline_mode = #tpu.pipeline_mode<synchronous>, transform_indices = @transform_7, window_bounds = array<i64: 200, 200>}, {pipeline_mode = #tpu.pipeline_mode<synchronous>, transform_indices = @transform_8, window_bounds = array<i64: 200, 1>}, {pipeline_mode = #tpu.pipeline_mode<synchronous>, transform_indices = @transform_9, window_bounds = array<i64: 100, 200>}, {pipeline_mode = #tpu.pipeline_mode<synchronous>, transform_indices = @transform_10, window_bounds = array<i64: 100, 1>}, {pipeline_mode = #tpu.pipeline_mode<synchronous>, transform_indices = @transform_11, window_bounds = array<i64: 30, 100>}, {pipeline_mode = #tpu.pipeline_mode<synchronous>, transform_indices = @transform_12, window_bounds = array<i64: 30, 1>}, {pipeline_mode = #tpu.pipeline_mode<synchronous>, transform_indices = @transform_13, window_bounds = array<i64: 30, 1>}, {pipeline_mode = #tpu.pipeline_mode<synchronous>, transform_indices = @transform_14, window_bounds = array<i64: 1, 1>}, {transform_indices = @transform_15, window_bounds = array<i64: 1, 128>}]} {
    %c0 = arith.constant 0 : index
    %c0_0 = arith.constant 0 : index
    %0 = vector.load %arg1[%c0, %c0_0] : memref<128x10xbf16, #tpu.memory_space<vmem>>, vector<128x10xbf16>
    %c0_1 = arith.constant 0 : index
    %c0_2 = arith.constant 0 : index
    %1 = vector.load %arg2[%c0_1, %c0_2] : memref<50x10xbf16, #tpu.memory_space<vmem>>, vector<50x10xbf16>
    %cst = arith.constant dense<0.000000e+00> : vector<50x128xf32>
    %2 = tpu.matmul %1, %0, %cst {dimension_numbers = #tpu.dot_dimension_numbers<[1], [1], [0], [0], [0, 0, 1, 0], [], []>} : vector<50x10xbf16>, vector<128x10xbf16>, vector<50x128xf32> -> vector<50x128xf32>
    %c0_3 = arith.constant 0 : index
    %c0_4 = arith.constant 0 : index
    %3 = vector.load %arg3[%c0_3, %c0_4] : memref<50x1xf32, #tpu.memory_space<vmem>>, vector<50x1xf32>
    %4 = vector.broadcast %3 : vector<50x1xf32> to vector<50x128xf32>
    %5 = arith.addf %2, %4 : vector<50x128xf32>
    %cst_5 = arith.constant 0.000000e+00 : f32
    %6 = vector.broadcast %cst_5 : f32 to vector<50x128xf32>
    %7 = arith.maximumf %5, %6 : vector<50x128xf32>
    %c0_6 = arith.constant 0 : index
    %c0_7 = arith.constant 0 : index
    %8 = vector.load %arg4[%c0_6, %c0_7] : memref<100x50xbf16, #tpu.memory_space<vmem>>, vector<100x50xbf16>
    %9 = arith.truncf %7 : vector<50x128xf32> to vector<50x128xbf16>
    %cst_8 = arith.constant dense<0.000000e+00> : vector<100x128xf32>
    %10 = tpu.matmul %8, %9, %cst_8 {dimension_numbers = #tpu.dot_dimension_numbers<[1], [0], [0], [1], [0, 0, 1, 1], [], []>} : vector<100x50xbf16>, vector<50x128xbf16>, vector<100x128xf32> -> vector<100x128xf32>
    %c0_9 = arith.constant 0 : index
    %c0_10 = arith.constant 0 : index
    %11 = vector.load %arg5[%c0_9, %c0_10] : memref<100x1xf32, #tpu.memory_space<vmem>>, vector<100x1xf32>
    %12 = vector.broadcast %11 : vector<100x1xf32> to vector<100x128xf32>
    %13 = arith.addf %10, %12 : vector<100x128xf32>
    %cst_11 = arith.constant 0.000000e+00 : f32
    %14 = vector.broadcast %cst_11 : f32 to vector<100x128xf32>
    %15 = arith.maximumf %13, %14 : vector<100x128xf32>
    %c0_12 = arith.constant 0 : index
    %c0_13 = arith.constant 0 : index
    %16 = vector.load %arg6[%c0_12, %c0_13] : memref<200x100xbf16, #tpu.memory_space<vmem>>, vector<200x100xbf16>
    %17 = arith.truncf %15 : vector<100x128xf32> to vector<100x128xbf16>
    %cst_14 = arith.constant dense<0.000000e+00> : vector<200x128xf32>
    %18 = tpu.matmul %16, %17, %cst_14 {dimension_numbers = #tpu.dot_dimension_numbers<[1], [0], [0], [1], [0, 0, 1, 1], [], []>} : vector<200x100xbf16>, vector<100x128xbf16>, vector<200x128xf32> -> vector<200x128xf32>
    %c0_15 = arith.constant 0 : index
    %c0_16 = arith.constant 0 : index
    %19 = vector.load %arg7[%c0_15, %c0_16] : memref<200x1xf32, #tpu.memory_space<vmem>>, vector<200x1xf32>
    %20 = vector.broadcast %19 : vector<200x1xf32> to vector<200x128xf32>
    %21 = arith.addf %18, %20 : vector<200x128xf32>
    %cst_17 = arith.constant 0.000000e+00 : f32
    %22 = vector.broadcast %cst_17 : f32 to vector<200x128xf32>
    %23 = arith.maximumf %21, %22 : vector<200x128xf32>
    %c0_18 = arith.constant 0 : index
    %c0_19 = arith.constant 0 : index
    %24 = vector.load %arg8[%c0_18, %c0_19] : memref<200x200xbf16, #tpu.memory_space<vmem>>, vector<200x200xbf16>
    %25 = arith.truncf %23 : vector<200x128xf32> to vector<200x128xbf16>
    %cst_20 = arith.constant dense<0.000000e+00> : vector<200x128xf32>
    %26 = tpu.matmul %24, %25, %cst_20 {dimension_numbers = #tpu.dot_dimension_numbers<[1], [0], [0], [1], [0, 0, 1, 1], [], []>} : vector<200x200xbf16>, vector<200x128xbf16>, vector<200x128xf32> -> vector<200x128xf32>
    %c0_21 = arith.constant 0 : index
    %c0_22 = arith.constant 0 : index
    %27 = vector.load %arg9[%c0_21, %c0_22] : memref<200x1xf32, #tpu.memory_space<vmem>>, vector<200x1xf32>
    %28 = vector.broadcast %27 : vector<200x1xf32> to vector<200x128xf32>
    %29 = arith.addf %26, %28 : vector<200x128xf32>
    %cst_23 = arith.constant 0.000000e+00 : f32
    %30 = vector.broadcast %cst_23 : f32 to vector<200x128xf32>
    %31 = arith.maximumf %29, %30 : vector<200x128xf32>
    %c0_24 = arith.constant 0 : index
    %c0_25 = arith.constant 0 : index
    %32 = vector.load %arg10[%c0_24, %c0_25] : memref<100x200xbf16, #tpu.memory_space<vmem>>, vector<100x200xbf16>
    %33 = arith.truncf %31 : vector<200x128xf32> to vector<200x128xbf16>
    %cst_26 = arith.constant dense<0.000000e+00> : vector<100x128xf32>
    %34 = tpu.matmul %32, %33, %cst_26 {dimension_numbers = #tpu.dot_dimension_numbers<[1], [0], [0], [1], [0, 0, 1, 1], [], []>} : vector<100x200xbf16>, vector<200x128xbf16>, vector<100x128xf32> -> vector<100x128xf32>
    %c0_27 = arith.constant 0 : index
    %c0_28 = arith.constant 0 : index
    %35 = vector.load %arg11[%c0_27, %c0_28] : memref<100x1xf32, #tpu.memory_space<vmem>>, vector<100x1xf32>
    %36 = vector.broadcast %35 : vector<100x1xf32> to vector<100x128xf32>
    %37 = arith.addf %34, %36 : vector<100x128xf32>
    %cst_29 = arith.constant 0.000000e+00 : f32
    %38 = vector.broadcast %cst_29 : f32 to vector<100x128xf32>
    %39 = arith.maximumf %37, %38 : vector<100x128xf32>
    %c0_30 = arith.constant 0 : index
    %c0_31 = arith.constant 0 : index
    %40 = vector.load %arg12[%c0_30, %c0_31] : memref<30x100xbf16, #tpu.memory_space<vmem>>, vector<30x100xbf16>
    %41 = arith.truncf %39 : vector<100x128xf32> to vector<100x128xbf16>
    %cst_32 = arith.constant dense<0.000000e+00> : vector<30x128xf32>
    %42 = tpu.matmul %40, %41, %cst_32 {dimension_numbers = #tpu.dot_dimension_numbers<[1], [0], [0], [1], [0, 0, 1, 1], [], []>} : vector<30x100xbf16>, vector<100x128xbf16>, vector<30x128xf32> -> vector<30x128xf32>
    %c0_33 = arith.constant 0 : index
    %c0_34 = arith.constant 0 : index
    %43 = vector.load %arg13[%c0_33, %c0_34] : memref<30x1xf32, #tpu.memory_space<vmem>>, vector<30x1xf32>
    %44 = vector.broadcast %43 : vector<30x1xf32> to vector<30x128xf32>
    %45 = arith.addf %42, %44 : vector<30x128xf32>
    %cst_35 = arith.constant 0.000000e+00 : f32
    %46 = vector.broadcast %cst_35 : f32 to vector<30x128xf32>
    %47 = arith.maximumf %45, %46 : vector<30x128xf32>
    %c0_36 = arith.constant 0 : index
    %c0_37 = arith.constant 0 : index
    %48 = vector.load %arg14[%c0_36, %c0_37] : memref<30x1xf32, #tpu.memory_space<vmem>>, vector<30x1xf32>
    %49 = vector.broadcast %48 : vector<30x1xf32> to vector<30x128xf32>
    %50 = arith.mulf %47, %49 : vector<30x128xf32>
    %cst_38 = arith.constant dense<0.000000e+00> : vector<128xf32>
    %51 = vector.multi_reduction <add>, %50, %cst_38 [0] : vector<30x128xf32> to vector<128xf32>
    %52 = vector.shape_cast %51 : vector<128xf32> to vector<1x128xf32>
    %c0_39 = arith.constant 0 : index
    %c0_40 = arith.constant 0 : index
    %53 = vector.load %arg15[%c0_39, %c0_40] : memref<1x1xf32, #tpu.memory_space<vmem>>, vector<1x1xf32>
    %54 = vector.broadcast %53 : vector<1x1xf32> to vector<1x128xf32>
    %55 = arith.addf %52, %54 : vector<1x128xf32>
    %c0_41 = arith.constant 0 : index
    %c0_42 = arith.constant 0 : index
    %56 = vector.load %arg16[%c0_41, %c0_42] : memref<1x128xf32, #tpu.memory_space<vmem>>, vector<1x128xf32>
    tpu.vector_store %arg16[%c0_41, %c0_42], %55 {strides = array<i32>} : memref<1x128xf32, #tpu.memory_space<vmem>>, vector<1x128xf32>,
    return
  }
  func.func @transform_0(%arg0: i32) -> (i32, i32) {
    %c0_i32 = arith.constant 0 : i32
    %c0_i32_0 = arith.constant 0 : i32
    return %arg0, %c0_i32 : i32, i32
  }
  func.func @transform_1(%arg0: i32) -> (i32, i32) {
    %c0_i32 = arith.constant 0 : i32
    %c0_i32_0 = arith.constant 0 : i32
    %c0_i32_1 = arith.constant 0 : i32
    return %c0_i32, %c0_i32_0 : i32, i32
  }
  func.func @transform_2(%arg0: i32) -> (i32, i32) {
    %c0_i32 = arith.constant 0 : i32
    %c0_i32_0 = arith.constant 0 : i32
    %c0_i32_1 = arith.constant 0 : i32
    return %c0_i32, %c0_i32_0 : i32, i32
  }
  func.func @transform_3(%arg0: i32) -> (i32, i32) {
    %c0_i32 = arith.constant 0 : i32
    %c0_i32_0 = arith.constant 0 : i32
    %c0_i32_1 = arith.constant 0 : i32
    return %c0_i32, %c0_i32_0 : i32, i32
  }
  func.func @transform_4(%arg0: i32) -> (i32, i32) {
    %c0_i32 = arith.constant 0 : i32
    %c0_i32_0 = arith.constant 0 : i32
    %c0_i32_1 = arith.constant 0 : i32
    return %c0_i32, %c0_i32_0 : i32, i32
  }
  func.func @transform_5(%arg0: i32) -> (i32, i32) {
    %c0_i32 = arith.constant 0 : i32
    %c0_i32_0 = arith.constant 0 : i32
    %c0_i32_1 = arith.constant 0 : i32
    return %c0_i32, %c0_i32_0 : i32, i32
  }
  func.func @transform_6(%arg0: i32) -> (i32, i32) {
    %c0_i32 = arith.constant 0 : i32
    %c0_i32_0 = arith.constant 0 : i32
    %c0_i32_1 = arith.constant 0 : i32
    return %c0_i32, %c0_i32_0 : i32, i32
  }
  func.func @transform_7(%arg0: i32) -> (i32, i32) {
    %c0_i32 = arith.constant 0 : i32
    %c0_i32_0 = arith.constant 0 : i32
    %c0_i32_1 = arith.constant 0 : i32
    return %c0_i32, %c0_i32_0 : i32, i32
  }
  func.func @transform_8(%arg0: i32) -> (i32, i32) {
    %c0_i32 = arith.constant 0 : i32
    %c0_i32_0 = arith.constant 0 : i32
    %c0_i32_1 = arith.constant 0 : i32
    return %c0_i32, %c0_i32_0 : i32, i32
  }
  func.func @transform_9(%arg0: i32) -> (i32, i32) {
    %c0_i32 = arith.constant 0 : i32
    %c0_i32_0 = arith.constant 0 : i32
    %c0_i32_1 = arith.constant 0 : i32
    return %c0_i32, %c0_i32_0 : i32, i32
  }
  func.func @transform_10(%arg0: i32) -> (i32, i32) {
    %c0_i32 = arith.constant 0 : i32
    %c0_i32_0 = arith.constant 0 : i32
    %c0_i32_1 = arith.constant 0 : i32
    return %c0_i32, %c0_i32_0 : i32, i32
  }
  func.func @transform_11(%arg0: i32) -> (i32, i32) {
    %c0_i32 = arith.constant 0 : i32
    %c0_i32_0 = arith.constant 0 : i32
    %c0_i32_1 = arith.constant 0 : i32
    return %c0_i32, %c0_i32_0 : i32, i32
  }
  func.func @transform_12(%arg0: i32) -> (i32, i32) {
    %c0_i32 = arith.constant 0 : i32
    %c0_i32_0 = arith.constant 0 : i32
    %c0_i32_1 = arith.constant 0 : i32
    return %c0_i32, %c0_i32_0 : i32, i32
  }
  func.func @transform_13(%arg0: i32) -> (i32, i32) {
    %c0_i32 = arith.constant 0 : i32
    %c0_i32_0 = arith.constant 0 : i32
    %c0_i32_1 = arith.constant 0 : i32
    return %c0_i32, %c0_i32_0 : i32, i32
  }
  func.func @transform_14(%arg0: i32) -> (i32, i32) {
    %c0_i32 = arith.constant 0 : i32
    %c0_i32_0 = arith.constant 0 : i32
    %c0_i32_1 = arith.constant 0 : i32
    return %c0_i32, %c0_i32_0 : i32, i32
  }
  func.func @transform_15(%arg0: i32) -> (i32, i32) {
    %c0_i32 = arith.constant 0 : i32
    %c0_i32_0 = arith.constant 0 : i32
    return %c0_i32, %arg0 : i32, i32
  }
}

</mosaic_0001>

<llo_original>
// kernel: tpu_custom_call.1
$region0: #{tpu_custom_call.1}
  #allocation0 [shape = 'u32[]', space=smem, size = 0x4, offset = 0x4, fixed_abs, tag = 'smem constant byte address 0x4 - core index']
  #allocation1 [shape = 'u32[144,128]{1,0:T(1,128)}', space=vmem, size = 0x12000, scoped, tag = 'internal scratch']
  #allocation2 [shape = 'f32[1,1]{1,0:T(1,128)S(1)}', space=vmem, size = 0x200, scoped, tag = 'scoped memory for tpu_custom_call.1']
  %s0 = inlined_call_operand.vmem [shape: bf16[128,10], index: 0, kind: input, shape index: {}]
  %s1 = inlined_call_operand.vmem [shape: bf16[50,10], index: 1, kind: input, shape index: {}]
  %s2 = inlined_call_operand.vmem [shape: f32[50,1], index: 2, kind: input, shape index: {}]
  %s3 = inlined_call_operand.vmem [shape: bf16[100,50], index: 3, kind: input, shape index: {}]
  %s4 = inlined_call_operand.vmem [shape: f32[100,1], index: 4, kind: input, shape index: {}]
  %s5 = inlined_call_operand.vmem [shape: bf16[200,100], index: 5, kind: input, shape index: {}]
  %s6 = inlined_call_operand.vmem [shape: f32[200,1], index: 6, kind: input, shape index: {}]
  %s7 = inlined_call_operand.vmem [shape: bf16[200,200], index: 7, kind: input, shape index: {}]
  %s8 = inlined_call_operand.vmem [shape: f32[200,1], index: 8, kind: input, shape index: {}]
  %s9 = inlined_call_operand.vmem [shape: bf16[100,200], index: 9, kind: input, shape index: {}]
  %s10 = inlined_call_operand.vmem [shape: f32[100,1], index: 10, kind: input, shape index: {}]
  %s11 = inlined_call_operand.vmem [shape: bf16[30,100], index: 11, kind: input, shape index: {}]
  %s12 = inlined_call_operand.vmem [shape: f32[30,1], index: 12, kind: input, shape index: {}]
  %s13 = inlined_call_operand.vmem [shape: f32[30,1], index: 13, kind: input, shape index: {}]
  %s14 = inlined_call_operand.<no memory space> [shape: f32[1,1], index: 14, kind: input, shape index: {}]
  %s15 = inlined_call_operand.hbm [shape: f32[1,128], index: 15, kind: output, shape index: {}]
  %s16 = sld [smem:[#allocation0]]
  $region70: #{tpu_custom_call.1} parent=0
    _
  %s18 = ssub.s32 1, %s16
  %s19 = scalar_select 0, %s18, %s16
  %v20 = vstv %s14
  %21 = vst [vmem:[#allocation2] sm:$0x1] %v20
  $region1: #{tpu_custom_call.1} parent=0
    #allocation3 [shape = 'u8[512]{0}', space=vmem, size = 0x400, scoped, tag = 'output window, operand 0, single buffered']
    #allocation4 [shape = 's32[1]{0}', space=sflag, size = 0x4, scoped, tag = 'scoped memory for tpu_custom_call.1']
    %22 = vsyncpa [#allocation4], 0
    // Predicated region
    $region2: #{tpu_custom_call.1} parent=1 // pred_check
      _
    $region3: #{tpu_custom_call.1} parent=1 // pred_check_branch
      %24 = sbr.rel (0) target = $region5
    $region4: #{tpu_custom_call.1} parent=1 // pred_region
      _
    $region5: #{tpu_custom_call.1} parent=1 // pred_fallthru
      _
    // Predicated region
    $region6: #{tpu_custom_call.1} parent=1 // pred_check
      _
    $region7: #{tpu_custom_call.1} parent=1 // pred_check_branch
      %26 = sbr.rel (0) target = $region9
    $region8: #{tpu_custom_call.1} parent=1 // pred_region
      _
    $region9: #{tpu_custom_call.1} parent=1 // pred_fallthru
      _
    // Predicated region
    $region10: #{tpu_custom_call.1} parent=1 // pred_check
      _
    $region11: #{tpu_custom_call.1} parent=1 // pred_check_branch
      %28 = sbr.rel (0) target = $region13
    $region12: #{tpu_custom_call.1} parent=1 // pred_region
      _
    $region13: #{tpu_custom_call.1} parent=1 // pred_fallthru
      _
    // Predicated region
    $region14: #{tpu_custom_call.1} parent=1 // pred_check
      _
    $region15: #{tpu_custom_call.1} parent=1 // pred_check_branch
      %30 = sbr.rel (0) target = $region17
    $region16: #{tpu_custom_call.1} parent=1 // pred_region
      _
    $region17: #{tpu_custom_call.1} parent=1 // pred_fallthru
      _
    // Predicated region
    $region18: #{tpu_custom_call.1} parent=1 // pred_check
      _
    $region19: #{tpu_custom_call.1} parent=1 // pred_check_branch
      %32 = sbr.rel (0) target = $region21
    $region20: #{tpu_custom_call.1} parent=1 // pred_region
      _
    $region21: #{tpu_custom_call.1} parent=1 // pred_fallthru
      _
    // Predicated region
    $region22: #{tpu_custom_call.1} parent=1 // pred_check
      _
    $region23: #{tpu_custom_call.1} parent=1 // pred_check_branch
      %34 = sbr.rel (0) target = $region25
    $region24: #{tpu_custom_call.1} parent=1 // pred_region
      _
    $region25: #{tpu_custom_call.1} parent=1 // pred_fallthru
      _
    // Predicated region
    $region26: #{tpu_custom_call.1} parent=1 // pred_check
      _
    $region27: #{tpu_custom_call.1} parent=1 // pred_check_branch
      %36 = sbr.rel (0) target = $region29
    $region28: #{tpu_custom_call.1} parent=1 // pred_region
      _
    $region29: #{tpu_custom_call.1} parent=1 // pred_fallthru
      _
    // Predicated region
    $region30: #{tpu_custom_call.1} parent=1 // pred_check
      _
    $region31: #{tpu_custom_call.1} parent=1 // pred_check_branch
      %38 = sbr.rel (0) target = $region33
    $region32: #{tpu_custom_call.1} parent=1 // pred_region
      _
    $region33: #{tpu_custom_call.1} parent=1 // pred_fallthru
      _
    // Predicated region
    $region34: #{tpu_custom_call.1} parent=1 // pred_check
      _
    $region35: #{tpu_custom_call.1} parent=1 // pred_check_branch
      %40 = sbr.rel (0) target = $region37
    $region36: #{tpu_custom_call.1} parent=1 // pred_region
      _
    $region37: #{tpu_custom_call.1} parent=1 // pred_fallthru
      _
    // Predicated region
    $region38: #{tpu_custom_call.1} parent=1 // pred_check
      _
    $region39: #{tpu_custom_call.1} parent=1 // pred_check_branch
      %42 = sbr.rel (0) target = $region41
    $region40: #{tpu_custom_call.1} parent=1 // pred_region
      _
    $region41: #{tpu_custom_call.1} parent=1 // pred_fallthru
      _
    // Predicated region
    $region42: #{tpu_custom_call.1} parent=1 // pred_check
      _
    $region43: #{tpu_custom_call.1} parent=1 // pred_check_branch
      %44 = sbr.rel (0) target = $region45
    $region44: #{tpu_custom_call.1} parent=1 // pred_region
      _
    $region45: #{tpu_custom_call.1} parent=1 // pred_fallthru
      _
    // Predicated region
    $region46: #{tpu_custom_call.1} parent=1 // pred_check
      _
    $region47: #{tpu_custom_call.1} parent=1 // pred_check_branch
      %46 = sbr.rel (0) target = $region49
    $region48: #{tpu_custom_call.1} parent=1 // pred_region
      _
    $region49: #{tpu_custom_call.1} parent=1 // pred_fallthru
      _
    // Predicated region
    $region50: #{tpu_custom_call.1} parent=1 // pred_check
      _
    $region51: #{tpu_custom_call.1} parent=1 // pred_check_branch
      %48 = sbr.rel (0) target = $region53
    $region52: #{tpu_custom_call.1} parent=1 // pred_region
      _
    $region53: #{tpu_custom_call.1} parent=1 // pred_fallthru
      _
    // Predicated region
    $region54: #{tpu_custom_call.1} parent=1 // pred_check
      _
    $region55: #{tpu_custom_call.1} parent=1 // pred_check_branch
      %50 = sbr.rel (0) target = $region57
    $region56: #{tpu_custom_call.1} parent=1 // pred_region
      _
    $region57: #{tpu_custom_call.1} parent=1 // pred_fallthru
      _
    // Predicated region
    $region58: #{tpu_custom_call.1} parent=1 // pred_check
      _
    $region59: #{tpu_custom_call.1} parent=1 // pred_check_branch
      %52 = sbr.rel (0) target = $region61
    $region60: #{tpu_custom_call.1} parent=1 // pred_region
      _
    $region61: #{tpu_custom_call.1} parent=1 // pred_fallthru
      _
    %v54 = vld [vmem:[%s0] sm:$0xf]
    %v55 = vld [vmem:[%s0 + $0x4] sm:$0xf]
    %v56 = vld [vmem:[%s0 + $0x8] sm:$0xf]
    %v57 = vld [vmem:[%s0 + $0xc] sm:$0xf]
    %v58 = vld [vmem:[%s0 + $0x10] sm:$0xf]
    %v59 = vld [vmem:[%s0 + $0x14] sm:$0xf]
    %v60 = vld [vmem:[%s0 + $0x18] sm:$0xf]
    %v61 = vld [vmem:[%s0 + $0x1c] sm:$0xf]
    %v62 = vld [vmem:[%s0 + $0x20] sm:$0xf]
    %v63 = vld [vmem:[%s0 + $0x24] sm:$0xf]
    %v64 = vld [vmem:[%s0 + $0x28] sm:$0xf]
    %v65 = vld [vmem:[%s0 + $0x2c] sm:$0xf]
    %v66 = vld [vmem:[%s0 + $0x30] sm:$0xf]
    %v67 = vld [vmem:[%s0 + $0x34] sm:$0xf]
    %v68 = vld [vmem:[%s0 + $0x38] sm:$0xf]
    %v69 = vld [vmem:[%s0 + $0x3c] sm:$0xf]
    %v70 = vld [vmem:[%s1] sm:$0xf]
    %v71 = vld [vmem:[%s1 + $0x4] sm:$0xf]
    %v72 = vld [vmem:[%s1 + $0x8] sm:$0xf]
    %v73 = vld [vmem:[%s1 + $0xc] sm:$0xf]
    %v74 = vld [vmem:[%s1 + $0x10] sm:$0xf]
    %v75 = vld [vmem:[%s1 + $0x14] sm:$0xf]
    %v76 = vld [vmem:[%s1 + $0x18] sm:$0x1]
    %v77 = vld [vmem:[%s2] sm:$0xff]
    %v78 = vld [vmem:[%s2 + $0x8] sm:$0xff]
    %v79 = vld [vmem:[%s2 + $0x10] sm:$0xff]
    %v80 = vld [vmem:[%s2 + $0x18] sm:$0xff]
    %v81 = vld [vmem:[%s2 + $0x20] sm:$0xff]
    %v82 = vld [vmem:[%s2 + $0x28] sm:$0xff]
    %v83 = vld [vmem:[%s2 + $0x30] sm:$0x3]
    %85 = vset.pattern.permute.xlu0 0
    %86 = vperm.xlu0 %85, %v77
    %v87 = vpop.permute.xlu0 %86
    %90 = vset.pattern.permute.xlu0 0
    %91 = vperm.xlu0 %90, %v78
    %v92 = vpop.permute.xlu0 %91
    %95 = vset.pattern.permute.xlu0 0
    %96 = vperm.xlu0 %95, %v79
    %v97 = vpop.permute.xlu0 %96
    %100 = vset.pattern.permute.xlu0 0
    %101 = vperm.xlu0 %100, %v80
    %v102 = vpop.permute.xlu0 %101
    %105 = vset.pattern.permute.xlu0 0
    %106 = vperm.xlu0 %105, %v81
    %v107 = vpop.permute.xlu0 %106
    %110 = vset.pattern.permute.xlu0 0
    %111 = vperm.xlu0 %110, %v82
    %v112 = vpop.permute.xlu0 %111
    %115 = vset.pattern.permute.xlu0 0
    %116 = vperm.xlu0 %115, %v83
    %v117 = vpop.permute.xlu0 %116
    %v126 = vunpack.c.l.b16 %v70
    %v127 = vunpack.c.l.b16 %v71
    %v128 = vunpack.c.l.b16 %v72
    %v129 = vunpack.c.l.b16 %v73
    %v130 = vunpack.c.l.b16 %v74
    %v131 = vunpack.c.l.b16 %v75
    %v132 = vunpack.c.l.b16 %v76
    %v133 = vpack.c.b16 %v127, %v126
    %v134 = vpack.c.b16 %v129, %v128
    %v135 = vpack.c.b16 %v131, %v130
    %v136 = vpack.c.b16 %v132, %v132
    %v153 = vunpack.c.l.b16 %v54
    %v154 = vunpack.c.l.b16 %v55
    %v155 = vunpack.c.l.b16 %v56
    %v156 = vunpack.c.l.b16 %v57
    %v157 = vunpack.c.l.b16 %v58
    %v158 = vunpack.c.l.b16 %v59
    %v159 = vunpack.c.l.b16 %v60
    %v160 = vunpack.c.l.b16 %v61
    %v161 = vunpack.c.l.b16 %v62
    %v162 = vunpack.c.l.b16 %v63
    %v163 = vunpack.c.l.b16 %v64
    %v164 = vunpack.c.l.b16 %v65
    %v165 = vunpack.c.l.b16 %v66
    %v166 = vunpack.c.l.b16 %v67
    %v167 = vunpack.c.l.b16 %v68
    %v168 = vunpack.c.l.b16 %v69
    %v169 = vpack.c.b16 %v154, %v153
    %v170 = vpack.c.b16 %v156, %v155
    %v171 = vpack.c.b16 %v158, %v157
    %v172 = vpack.c.b16 %v160, %v159
    %v173 = vpack.c.b16 %v162, %v161
    %v174 = vpack.c.b16 %v164, %v163
    %v175 = vpack.c.b16 %v166, %v165
    %v176 = vpack.c.b16 %v168, %v167
    %vm177 = vcmask 80896
    %v179 = vsel %vm177, %v133, 0
    %v182 = vsel %vm177, %v134, 0
    %v185 = vsel %vm177, %v135, 0
    %v188 = vsel %vm177, %v136, 0
    %v191 = vsel %vm177, %v169, 0
    %v194 = vsel %vm177, %v170, 0
    %v197 = vsel %vm177, %v171, 0
    %v200 = vsel %vm177, %v172, 0
    %v203 = vsel %vm177, %v173, 0
    %v206 = vsel %vm177, %v174, 0
    %v209 = vsel %vm177, %v175, 0
    %v212 = vsel %vm177, %v176, 0
    %214 = vmatprep.subr.bf16.mxu0 0
    %215 = vmatpush1.bf16.xpose.msra.mxu0 %v191
    %216 = vmatprep.subr.bf16.mxu0 0
    %217 = vmatpush1.bf16.xpose.msra.mxu0 %v194
    %218 = vmatprep.subr.bf16.mxu0 0
    %219 = vmatpush1.bf16.xpose.msra.mxu0 %v197
    %220 = vmatprep.subr.bf16.mxu0 0
    %221 = vmatpush1.bf16.xpose.msra.mxu0 %v200
    %222 = vmatprep.subr.bf16.mxu0 0
    %223 = vmatpush1.bf16.xpose.msra.mxu0 %v203
    %224 = vmatprep.subr.bf16.mxu0 0
    %225 = vmatpush1.bf16.xpose.msra.mxu0 %v206
    %226 = vmatprep.subr.bf16.mxu0 0
    %227 = vmatpush1.bf16.xpose.msra.mxu0 %v209
    %228 = vmatprep.subr.bf16.mxu0 0
    %229 = vmatpush1.bf16.xpose.msra.mxu0 %v212
    %230 = vmatprep.subr.bf16.mxu0 0
    %231 = vmatpush1.bf16.xpose.msra.mxu0 0
    %232 = vmatprep.subr.bf16.mxu0 0
    %233 = vmatpush1.bf16.xpose.msra.mxu0 0
    %234 = vmatprep.subr.bf16.mxu0 0
    %235 = vmatpush1.bf16.xpose.msra.mxu0 0
    %236 = vmatprep.subr.bf16.mxu0 0
    %237 = vmatpush1.bf16.xpose.msra.mxu0 0
    %238 = vmatprep.subr.bf16.mxu0 0
    %239 = vmatpush1.bf16.xpose.msra.mxu0 0
    %240 = vmatprep.subr.bf16.mxu0 0
    %241 = vmatpush1.bf16.xpose.msra.mxu0 0
    %242 = vmatprep.subr.bf16.mxu0 0
    %243 = vmatpush1.bf16.xpose.msra.mxu0 0
    %244 = vmatprep.subr.bf16.mxu0 0
    %245 = vmatpush1.bf16.xpose.msra.mxu0 0
    %246 = vmatprep.mubr.bf16.mxu0 0
    %247 = vmatmul.mubr.bf16.gmra.mrb[0].mxu0 %v179
    %v248 = vpop.f32.mrb[0].mxu0
    %v249 = vadd.f32 %v87, %v248
    %v250 = vpop.f32.mrb[0].mxu0
    %v251 = vpop.f32.mrb[0].mxu0
    %v252 = vadd.f32 %v92, %v251
    %v253 = vpop.f32.mrb[0].mxu0
    %254 = vmatprep.mubr.bf16.mxu0 0
    %255 = vmatmul.mubr.bf16.gmra.mrb[0].mxu0 %v182
    %v256 = vpop.f32.mrb[0].mxu0
    %v257 = vadd.f32 %v97, %v256
    %v258 = vpop.f32.mrb[0].mxu0
    %v259 = vpop.f32.mrb[0].mxu0
    %v260 = vadd.f32 %v102, %v259
    %v261 = vpop.f32.mrb[0].mxu0
    %262 = vmatprep.mubr.bf16.mxu0 0
    %263 = vmatmul.mubr.bf16.gmra.mrb[0].mxu0 %v185
    %v264 = vpop.f32.mrb[0].mxu0
    %v265 = vadd.f32 %v107, %v264
    %v266 = vpop.f32.mrb[0].mxu0
    %v267 = vpop.f32.mrb[0].mxu0
    %v268 = vadd.f32 %v112, %v267
    %v269 = vpop.f32.mrb[0].mxu0
    %270 = vmatprep.mubr.bf16.mxu0 0
    %271 = vmatmul.mubr.bf16.gmra.mrb[0].mxu0 %v188
    %v272 = vpop.f32.mrb[0].mxu0
    %v273 = vadd.f32 %v117, %v272
    %v274 = vpop.f32.mrb[0].mxu0
    %v275 = vpop.f32.mrb[0].mxu0
    %v276 = vpop.f32.mrb[0].mxu0
    %277 = vdwg.mxu0
    %v278 = vmax.f32 %v249, 0.0
    %v279 = vmax.f32 %v252, 0.0
    %v280 = vmax.f32 %v257, 0.0
    %v281 = vmax.f32 %v260, 0.0
    %v282 = vmax.f32 %v265, 0.0
    %v283 = vmax.f32 %v268, 0.0
    %v284 = vmax.f32 %v273, 0.0
    %v285 = vld [vmem:[%s3] sm:$0xf]
    %v286 = vld [vmem:[%s3 + $0x4] sm:$0xf]
    %v287 = vld [vmem:[%s3 + $0x8] sm:$0xf]
    %v288 = vld [vmem:[%s3 + $0xc] sm:$0xf]
    %v289 = vld [vmem:[%s3 + $0x10] sm:$0xf]
    %v290 = vld [vmem:[%s3 + $0x14] sm:$0xf]
    %v291 = vld [vmem:[%s3 + $0x18] sm:$0xf]
    %v292 = vld [vmem:[%s3 + $0x1c] sm:$0xf]
    %v293 = vld [vmem:[%s3 + $0x20] sm:$0xf]
    %v294 = vld [vmem:[%s3 + $0x24] sm:$0xf]
    %v295 = vld [vmem:[%s3 + $0x28] sm:$0xf]
    %v296 = vld [vmem:[%s3 + $0x2c] sm:$0xf]
    %v297 = vld [vmem:[%s3 + $0x30] sm:$0x3]
    %v298 = vpack.c.bf16 %v279, %v278
    %v299 = vpack.c.bf16 %v281, %v280
    %v300 = vpack.c.bf16 %v283, %v282
    %v301 = vpack.c.bf16 %v284, %v284
    %v302 = vld [vmem:[%s4] sm:$0xff]
    %v303 = vld [vmem:[%s4 + $0x8] sm:$0xff]
    %v304 = vld [vmem:[%s4 + $0x10] sm:$0xff]
    %v305 = vld [vmem:[%s4 + $0x18] sm:$0xff]
    %v306 = vld [vmem:[%s4 + $0x20] sm:$0xff]
    %v307 = vld [vmem:[%s4 + $0x28] sm:$0xff]
    %v308 = vld [vmem:[%s4 + $0x30] sm:$0xff]
    %v309 = vld [vmem:[%s4 + $0x38] sm:$0xff]
    %v310 = vld [vmem:[%s4 + $0x40] sm:$0xff]
    %v311 = vld [vmem:[%s4 + $0x48] sm:$0xff]
    %v312 = vld [vmem:[%s4 + $0x50] sm:$0xff]
    %v313 = vld [vmem:[%s4 + $0x58] sm:$0xff]
    %v314 = vld [vmem:[%s4 + $0x60] sm:$0xf]
    %316 = vset.pattern.permute.xlu0 0
    %317 = vperm.xlu0 %316, %v302
    %v318 = vpop.permute.xlu0 %317
    %321 = vset.pattern.permute.xlu0 0
    %322 = vperm.xlu0 %321, %v303
    %v323 = vpop.permute.xlu0 %322
    %326 = vset.pattern.permute.xlu0 0
    %327 = vperm.xlu0 %326, %v304
    %v328 = vpop.permute.xlu0 %327
    %331 = vset.pattern.permute.xlu0 0
    %332 = vperm.xlu0 %331, %v305
    %v333 = vpop.permute.xlu0 %332
    %336 = vset.pattern.permute.xlu0 0
    %337 = vperm.xlu0 %336, %v306
    %v338 = vpop.permute.xlu0 %337
    %341 = vset.pattern.permute.xlu0 0
    %342 = vperm.xlu0 %341, %v307
    %v343 = vpop.permute.xlu0 %342
    %346 = vset.pattern.permute.xlu0 0
    %347 = vperm.xlu0 %346, %v308
    %v348 = vpop.permute.xlu0 %347
    %351 = vset.pattern.permute.xlu0 0
    %352 = vperm.xlu0 %351, %v309
    %v353 = vpop.permute.xlu0 %352
    %356 = vset.pattern.permute.xlu0 0
    %357 = vperm.xlu0 %356, %v310
    %v358 = vpop.permute.xlu0 %357
    %361 = vset.pattern.permute.xlu0 0
    %362 = vperm.xlu0 %361, %v311
    %v363 = vpop.permute.xlu0 %362
    %366 = vset.pattern.permute.xlu0 0
    %367 = vperm.xlu0 %366, %v312
    %v368 = vpop.permute.xlu0 %367
    %371 = vset.pattern.permute.xlu0 0
    %372 = vperm.xlu0 %371, %v313
    %v373 = vpop.permute.xlu0 %372
    %376 = vset.pattern.permute.xlu0 0
    %377 = vperm.xlu0 %376, %v314
    %v378 = vpop.permute.xlu0 %377
    %v393 = vunpack.c.l.b16 %v285
    %v394 = vunpack.c.l.b16 %v286
    %v395 = vunpack.c.l.b16 %v287
    %v396 = vunpack.c.l.b16 %v288
    %v397 = vunpack.c.l.b16 %v289
    %v398 = vunpack.c.l.b16 %v290
    %v399 = vunpack.c.l.b16 %v291
    %v400 = vunpack.c.l.b16 %v292
    %v401 = vunpack.c.l.b16 %v293
    %v402 = vunpack.c.l.b16 %v294
    %v403 = vunpack.c.l.b16 %v295
    %v404 = vunpack.c.l.b16 %v296
    %v405 = vunpack.c.l.b16 %v297
    %v406 = vpack.c.b16 %v394, %v393
    %v407 = vpack.c.b16 %v396, %v395
    %v408 = vpack.c.b16 %v398, %v397
    %v409 = vpack.c.b16 %v400, %v399
    %v410 = vpack.c.b16 %v402, %v401
    %v411 = vpack.c.b16 %v404, %v403
    %v412 = vpack.c.b16 %v405, %v405
    %vm413 = vcmask 408576
    %v415 = vsel %vm413, %v406, 0
    %v418 = vsel %vm413, %v407, 0
    %v421 = vsel %vm413, %v408, 0
    %v424 = vsel %vm413, %v409, 0
    %v427 = vsel %vm413, %v410, 0
    %v430 = vsel %vm413, %v411, 0
    %v433 = vsel %vm413, %v412, 0
    %vm435 = vcmask 1040384
    %v437 = vsel %vm435, %v301, 0
    %439 = vmatprep.subr.bf16.mxu0 0
    %440 = vmatpush1.bf16.msra.mxu0 %v298
    %441 = vmatprep.subr.bf16.mxu0 0
    %442 = vmatpush1.bf16.msra.mxu0 %v299
    %443 = vmatprep.subr.bf16.mxu0 0
    %444 = vmatpush1.bf16.msra.mxu0 %v300
    %445 = vmatprep.subr.bf16.mxu0 0
    %446 = vmatpush1.bf16.msra.mxu0 %v437
    %447 = vmatprep.subr.bf16.mxu0 0
    %448 = vmatpush1.bf16.msra.mxu0 0
    %449 = vmatprep.subr.bf16.mxu0 0
    %450 = vmatpush1.bf16.msra.mxu0 0
    %451 = vmatprep.subr.bf16.mxu0 0
    %452 = vmatpush1.bf16.msra.mxu0 0
    %453 = vmatprep.subr.bf16.mxu0 0
    %454 = vmatpush1.bf16.msra.mxu0 0
    %455 = vmatprep.subr.bf16.mxu0 0
    %456 = vmatpush1.bf16.msra.mxu0 0
    %457 = vmatprep.subr.bf16.mxu0 0
    %458 = vmatpush1.bf16.msra.mxu0 0
    %459 = vmatprep.subr.bf16.mxu0 0
    %460 = vmatpush1.bf16.msra.mxu0 0
    %461 = vmatprep.subr.bf16.mxu0 0
    %462 = vmatpush1.bf16.msra.mxu0 0
    %463 = vmatprep.subr.bf16.mxu0 0
    %464 = vmatpush1.bf16.msra.mxu0 0
    %465 = vmatprep.subr.bf16.mxu0 0
    %466 = vmatpush1.bf16.msra.mxu0 0
    %467 = vmatprep.subr.bf16.mxu0 0
    %468 = vmatpush1.bf16.msra.mxu0 0
    %469 = vmatprep.subr.bf16.mxu0 0
    %470 = vmatpush1.bf16.msra.mxu0 0
    %471 = vmatprep.mubr.bf16.mxu0 0
    %472 = vmatmul.mubr.bf16.gmra.mrb[0].mxu0 %v415
    %v473 = vpop.f32.mrb[0].mxu0
    %v474 = vadd.f32 %v318, %v473
    %v475 = vpop.f32.mrb[0].mxu0
    %v476 = vpop.f32.mrb[0].mxu0
    %v477 = vadd.f32 %v323, %v476
    %v478 = vpop.f32.mrb[0].mxu0
    %479 = vmatprep.mubr.bf16.mxu0 0
    %480 = vmatmul.mubr.bf16.gmra.mrb[0].mxu0 %v418
    %v481 = vpop.f32.mrb[0].mxu0
    %v482 = vadd.f32 %v328, %v481
    %v483 = vpop.f32.mrb[0].mxu0
    %v484 = vpop.f32.mrb[0].mxu0
    %v485 = vadd.f32 %v333, %v484
    %v486 = vpop.f32.mrb[0].mxu0
    %487 = vmatprep.mubr.bf16.mxu0 0
    %488 = vmatmul.mubr.bf16.gmra.mrb[0].mxu0 %v421
    %v489 = vpop.f32.mrb[0].mxu0
    %v490 = vadd.f32 %v338, %v489
    %v491 = vpop.f32.mrb[0].mxu0
    %v492 = vpop.f32.mrb[0].mxu0
    %v493 = vadd.f32 %v343, %v492
    %v494 = vpop.f32.mrb[0].mxu0
    %495 = vmatprep.mubr.bf16.mxu0 0
    %496 = vmatmul.mubr.bf16.gmra.mrb[0].mxu0 %v424
    %v497 = vpop.f32.mrb[0].mxu0
    %v498 = vadd.f32 %v348, %v497
    %v499 = vpop.f32.mrb[0].mxu0
    %v500 = vpop.f32.mrb[0].mxu0
    %v501 = vadd.f32 %v353, %v500
    %v502 = vpop.f32.mrb[0].mxu0
    %503 = vmatprep.mubr.bf16.mxu0 0
    %504 = vmatmul.mubr.bf16.gmra.mrb[0].mxu0 %v427
    %v505 = vpop.f32.mrb[0].mxu0
    %v506 = vadd.f32 %v358, %v505
    %v507 = vpop.f32.mrb[0].mxu0
    %v508 = vpop.f32.mrb[0].mxu0
    %v509 = vadd.f32 %v363, %v508
    %v510 = vpop.f32.mrb[0].mxu0
    %511 = vmatprep.mubr.bf16.mxu0 0
    %512 = vmatmul.mubr.bf16.gmra.mrb[0].mxu0 %v430
    %v513 = vpop.f32.mrb[0].mxu0
    %v514 = vadd.f32 %v368, %v513
    %v515 = vpop.f32.mrb[0].mxu0
    %v516 = vpop.f32.mrb[0].mxu0
    %v517 = vadd.f32 %v373, %v516
    %v518 = vpop.f32.mrb[0].mxu0
    %519 = vmatprep.mubr.bf16.mxu0 0
    %520 = vmatmul.mubr.bf16.gmra.mrb[0].mxu0 %v433
    %v521 = vpop.f32.mrb[0].mxu0
    %v522 = vadd.f32 %v378, %v521
    %v523 = vpop.f32.mrb[0].mxu0
    %v524 = vpop.f32.mrb[0].mxu0
    %v525 = vpop.f32.mrb[0].mxu0
    %526 = vdwg.mxu0
    %v527 = vmax.f32 %v474, 0.0
    %v528 = vmax.f32 %v477, 0.0
    %v529 = vmax.f32 %v482, 0.0
    %v530 = vmax.f32 %v485, 0.0
    %v531 = vmax.f32 %v490, 0.0
    %v532 = vmax.f32 %v493, 0.0
    %v533 = vmax.f32 %v498, 0.0
    %v534 = vmax.f32 %v501, 0.0
    %v535 = vmax.f32 %v506, 0.0
    %v536 = vmax.f32 %v509, 0.0
    %v537 = vmax.f32 %v514, 0.0
    %v538 = vmax.f32 %v517, 0.0
    %v539 = vmax.f32 %v522, 0.0
    %v540 = vld [vmem:[%s5] sm:$0xf]
    %v541 = vld [vmem:[%s5 + $0x4] sm:$0xf]
    %v542 = vld [vmem:[%s5 + $0x8] sm:$0xf]
    %v543 = vld [vmem:[%s5 + $0xc] sm:$0xf]
    %v544 = vld [vmem:[%s5 + $0x10] sm:$0xf]
    %v545 = vld [vmem:[%s5 + $0x14] sm:$0xf]
    %v546 = vld [vmem:[%s5 + $0x18] sm:$0xf]
    %v547 = vld [vmem:[%s5 + $0x1c] sm:$0xf]
    %v548 = vld [vmem:[%s5 + $0x20] sm:$0xf]
    %v549 = vld [vmem:[%s5 + $0x24] sm:$0xf]
    %v550 = vld [vmem:[%s5 + $0x28] sm:$0xf]
    %v551 = vld [vmem:[%s5 + $0x2c] sm:$0xf]
    %v552 = vld [vmem:[%s5 + $0x30] sm:$0xf]
    %v553 = vld [vmem:[%s5 + $0x34] sm:$0xf]
    %v554 = vld [vmem:[%s5 + $0x38] sm:$0xf]
    %v555 = vld [vmem:[%s5 + $0x3c] sm:$0xf]
    %v556 = vld [vmem:[%s5 + $0x40] sm:$0xf]
    %v557 = vld [vmem:[%s5 + $0x44] sm:$0xf]
    %v558 = vld [vmem:[%s5 + $0x48] sm:$0xf]
    %v559 = vld [vmem:[%s5 + $0x4c] sm:$0xf]
    %v560 = vld [vmem:[%s5 + $0x50] sm:$0xf]
    %v561 = vld [vmem:[%s5 + $0x54] sm:$0xf]
    %v562 = vld [vmem:[%s5 + $0x58] sm:$0xf]
    %v563 = vld [vmem:[%s5 + $0x5c] sm:$0xf]
    %v564 = vld [vmem:[%s5 + $0x60] sm:$0xf]
    %v565 = vpack.c.bf16 %v528, %v527
    %v566 = vpack.c.bf16 %v530, %v529
    %v567 = vpack.c.bf16 %v532, %v531
    %v568 = vpack.c.bf16 %v534, %v533
    %v569 = vpack.c.bf16 %v536, %v535
    %v570 = vpack.c.bf16 %v538, %v537
    %v571 = vpack.c.bf16 %v539, %v539
    %v572 = vld [vmem:[%s6] sm:$0xff]
    %v573 = vld [vmem:[%s6 + $0x8] sm:$0xff]
    %v574 = vld [vmem:[%s6 + $0x10] sm:$0xff]
    %v575 = vld [vmem:[%s6 + $0x18] sm:$0xff]
    %v576 = vld [vmem:[%s6 + $0x20] sm:$0xff]
    %v577 = vld [vmem:[%s6 + $0x28] sm:$0xff]
    %v578 = vld [vmem:[%s6 + $0x30] sm:$0xff]
    %v579 = vld [vmem:[%s6 + $0x38] sm:$0xff]
    %v580 = vld [vmem:[%s6 + $0x40] sm:$0xff]
    %v581 = vld [vmem:[%s6 + $0x48] sm:$0xff]
    %v582 = vld [vmem:[%s6 + $0x50] sm:$0xff]
    %v583 = vld [vmem:[%s6 + $0x58] sm:$0xff]
    %v584 = vld [vmem:[%s6 + $0x60] sm:$0xff]
    %v585 = vld [vmem:[%s6 + $0x68] sm:$0xff]
    %v586 = vld [vmem:[%s6 + $0x70] sm:$0xff]
    %v587 = vld [vmem:[%s6 + $0x78] sm:$0xff]
    %v588 = vld [vmem:[%s6 + $0x80] sm:$0xff]
    %v589 = vld [vmem:[%s6 + $0x88] sm:$0xff]
    %v590 = vld [vmem:[%s6 + $0x90] sm:$0xff]
    %v591 = vld [vmem:[%s6 + $0x98] sm:$0xff]
    %v592 = vld [vmem:[%s6 + $0xa0] sm:$0xff]
    %v593 = vld [vmem:[%s6 + $0xa8] sm:$0xff]
    %v594 = vld [vmem:[%s6 + $0xb0] sm:$0xff]
    %v595 = vld [vmem:[%s6 + $0xb8] sm:$0xff]
    %v596 = vld [vmem:[%s6 + $0xc0] sm:$0xff]
    %598 = vset.pattern.permute.xlu0 0
    %599 = vperm.xlu0 %598, %v572
    %v600 = vpop.permute.xlu0 %599
    %603 = vset.pattern.permute.xlu0 0
    %604 = vperm.xlu0 %603, %v573
    %v605 = vpop.permute.xlu0 %604
    %608 = vset.pattern.permute.xlu0 0
    %609 = vperm.xlu0 %608, %v574
    %v610 = vpop.permute.xlu0 %609
    %613 = vset.pattern.permute.xlu0 0
    %614 = vperm.xlu0 %613, %v575
    %v615 = vpop.permute.xlu0 %614
    %618 = vset.pattern.permute.xlu0 0
    %619 = vperm.xlu0 %618, %v576
    %v620 = vpop.permute.xlu0 %619
    %623 = vset.pattern.permute.xlu0 0
    %624 = vperm.xlu0 %623, %v577
    %v625 = vpop.permute.xlu0 %624
    %628 = vset.pattern.permute.xlu0 0
    %629 = vperm.xlu0 %628, %v578
    %v630 = vpop.permute.xlu0 %629
    %633 = vset.pattern.permute.xlu0 0
    %634 = vperm.xlu0 %633, %v579
    %v635 = vpop.permute.xlu0 %634
    %638 = vset.pattern.permute.xlu0 0
    %639 = vperm.xlu0 %638, %v580
    %v640 = vpop.permute.xlu0 %639
    %643 = vset.pattern.permute.xlu0 0
    %644 = vperm.xlu0 %643, %v581
    %v645 = vpop.permute.xlu0 %644
    %648 = vset.pattern.permute.xlu0 0
    %649 = vperm.xlu0 %648, %v582
    %v650 = vpop.permute.xlu0 %649
    %653 = vset.pattern.permute.xlu0 0
    %654 = vperm.xlu0 %653, %v583
    %v655 = vpop.permute.xlu0 %654
    %658 = vset.pattern.permute.xlu0 0
    %659 = vperm.xlu0 %658, %v584
    %v660 = vpop.permute.xlu0 %659
    %663 = vset.pattern.permute.xlu0 0
    %664 = vperm.xlu0 %663, %v585
    %v665 = vpop.permute.xlu0 %664
    %668 = vset.pattern.permute.xlu0 0
    %669 = vperm.xlu0 %668, %v586
    %v670 = vpop.permute.xlu0 %669
    %673 = vset.pattern.permute.xlu0 0
    %674 = vperm.xlu0 %673, %v587
    %v675 = vpop.permute.xlu0 %674
    %678 = vset.pattern.permute.xlu0 0
    %679 = vperm.xlu0 %678, %v588
    %v680 = vpop.permute.xlu0 %679
    %683 = vset.pattern.permute.xlu0 0
    %684 = vperm.xlu0 %683, %v589
    %v685 = vpop.permute.xlu0 %684
    %688 = vset.pattern.permute.xlu0 0
    %689 = vperm.xlu0 %688, %v590
    %v690 = vpop.permute.xlu0 %689
    %693 = vset.pattern.permute.xlu0 0
    %694 = vperm.xlu0 %693, %v591
    %v695 = vpop.permute.xlu0 %694
    %698 = vset.pattern.permute.xlu0 0
    %699 = vperm.xlu0 %698, %v592
    %v700 = vpop.permute.xlu0 %699
    %703 = vset.pattern.permute.xlu0 0
    %704 = vperm.xlu0 %703, %v593
    %v705 = vpop.permute.xlu0 %704
    %708 = vset.pattern.permute.xlu0 0
    %709 = vperm.xlu0 %708, %v594
    %v710 = vpop.permute.xlu0 %709
    %713 = vset.pattern.permute.xlu0 0
    %714 = vperm.xlu0 %713, %v595
    %v715 = vpop.permute.xlu0 %714
    %718 = vset.pattern.permute.xlu0 0
    %719 = vperm.xlu0 %718, %v596
    %v720 = vpop.permute.xlu0 %719
    %v747 = vunpack.c.l.b16 %v540
    %v748 = vunpack.c.l.b16 %v541
    %v749 = vunpack.c.l.b16 %v542
    %v750 = vunpack.c.l.b16 %v543
    %v751 = vunpack.c.l.b16 %v544
    %v752 = vunpack.c.l.b16 %v545
    %v753 = vunpack.c.l.b16 %v546
    %v754 = vunpack.c.l.b16 %v547
    %v755 = vunpack.c.l.b16 %v548
    %v756 = vunpack.c.l.b16 %v549
    %v757 = vunpack.c.l.b16 %v550
    %v758 = vunpack.c.l.b16 %v551
    %v759 = vunpack.c.l.b16 %v552
    %v760 = vunpack.c.l.b16 %v553
    %v761 = vunpack.c.l.b16 %v554
    %v762 = vunpack.c.l.b16 %v555
    %v763 = vunpack.c.l.b16 %v556
    %v764 = vunpack.c.l.b16 %v557
    %v765 = vunpack.c.l.b16 %v558
    %v766 = vunpack.c.l.b16 %v559
    %v767 = vunpack.c.l.b16 %v560
    %v768 = vunpack.c.l.b16 %v561
    %v769 = vunpack.c.l.b16 %v562
    %v770 = vunpack.c.l.b16 %v563
    %v771 = vunpack.c.l.b16 %v564
    %v772 = vpack.c.b16 %v748, %v747
    %v773 = vpack.c.b16 %v750, %v749
    %v774 = vpack.c.b16 %v752, %v751
    %v775 = vpack.c.b16 %v754, %v753
    %v776 = vpack.c.b16 %v756, %v755
    %v777 = vpack.c.b16 %v758, %v757
    %v778 = vpack.c.b16 %v760, %v759
    %v779 = vpack.c.b16 %v762, %v761
    %v780 = vpack.c.b16 %v764, %v763
    %v781 = vpack.c.b16 %v766, %v765
    %v782 = vpack.c.b16 %v768, %v767
    %v783 = vpack.c.b16 %v770, %v769
    %v784 = vpack.c.b16 %v771, %v771
    %vm785 = vcmask 818176
    %v787 = vsel %vm785, %v772, 0
    %v790 = vsel %vm785, %v773, 0
    %v793 = vsel %vm785, %v774, 0
    %v796 = vsel %vm785, %v775, 0
    %v799 = vsel %vm785, %v776, 0
    %v802 = vsel %vm785, %v777, 0
    %v805 = vsel %vm785, %v778, 0
    %v808 = vsel %vm785, %v779, 0
    %v811 = vsel %vm785, %v780, 0
    %v814 = vsel %vm785, %v781, 0
    %v817 = vsel %vm785, %v782, 0
    %v820 = vsel %vm785, %v783, 0
    %v823 = vsel %vm785, %v784, 0
    %vm825 = vcmask 1041408
    %v827 = vsel %vm825, %v571, 0
    %829 = vmatprep.subr.bf16.mxu0 0
    %830 = vmatpush1.bf16.msra.mxu0 %v565
    %831 = vmatprep.subr.bf16.mxu0 0
    %832 = vmatpush1.bf16.msra.mxu0 %v566
    %833 = vmatprep.subr.bf16.mxu0 0
    %834 = vmatpush1.bf16.msra.mxu0 %v567
    %835 = vmatprep.subr.bf16.mxu0 0
    %836 = vmatpush1.bf16.msra.mxu0 %v568
    %837 = vmatprep.subr.bf16.mxu0 0
    %838 = vmatpush1.bf16.msra.mxu0 %v569
    %839 = vmatprep.subr.bf16.mxu0 0
    %840 = vmatpush1.bf16.msra.mxu0 %v570
    %841 = vmatprep.subr.bf16.mxu0 0
    %842 = vmatpush1.bf16.msra.mxu0 %v827
    %843 = vmatprep.subr.bf16.mxu0 0
    %844 = vmatpush1.bf16.msra.mxu0 0
    %845 = vmatprep.subr.bf16.mxu0 0
    %846 = vmatpush1.bf16.msra.mxu0 0
    %847 = vmatprep.subr.bf16.mxu0 0
    %848 = vmatpush1.bf16.msra.mxu0 0
    %849 = vmatprep.subr.bf16.mxu0 0
    %850 = vmatpush1.bf16.msra.mxu0 0
    %851 = vmatprep.subr.bf16.mxu0 0
    %852 = vmatpush1.bf16.msra.mxu0 0
    %853 = vmatprep.subr.bf16.mxu0 0
    %854 = vmatpush1.bf16.msra.mxu0 0
    %855 = vmatprep.subr.bf16.mxu0 0
    %856 = vmatpush1.bf16.msra.mxu0 0
    %857 = vmatprep.subr.bf16.mxu0 0
    %858 = vmatpush1.bf16.msra.mxu0 0
    %859 = vmatprep.subr.bf16.mxu0 0
    %860 = vmatpush1.bf16.msra.mxu0 0
    %861 = vmatprep.mubr.bf16.mxu0 0
    %862 = vmatmul.mubr.bf16.gmra.mrb[0].mxu0 %v787
    %v863 = vpop.f32.mrb[0].mxu0
    %v864 = vadd.f32 %v600, %v863
    %v865 = vpop.f32.mrb[0].mxu0
    %v866 = vpop.f32.mrb[0].mxu0
    %v867 = vadd.f32 %v605, %v866
    %v868 = vpop.f32.mrb[0].mxu0
    %869 = vmatprep.mubr.bf16.mxu0 0
    %870 = vmatmul.mubr.bf16.gmra.mrb[0].mxu0 %v790
    %v871 = vpop.f32.mrb[0].mxu0
    %v872 = vadd.f32 %v610, %v871
    %v873 = vpop.f32.mrb[0].mxu0
    %v874 = vpop.f32.mrb[0].mxu0
    %v875 = vadd.f32 %v615, %v874
    %v876 = vpop.f32.mrb[0].mxu0
    %877 = vmatprep.mubr.bf16.mxu0 0
    %878 = vmatmul.mubr.bf16.gmra.mrb[0].mxu0 %v793
    %v879 = vpop.f32.mrb[0].mxu0
    %v880 = vadd.f32 %v620, %v879
    %v881 = vpop.f32.mrb[0].mxu0
    %v882 = vpop.f32.mrb[0].mxu0
    %v883 = vadd.f32 %v625, %v882
    %v884 = vpop.f32.mrb[0].mxu0
    %885 = vmatprep.mubr.bf16.mxu0 0
    %886 = vmatmul.mubr.bf16.gmra.mrb[0].mxu0 %v796
    %v887 = vpop.f32.mrb[0].mxu0
    %v888 = vadd.f32 %v630, %v887
    %v889 = vpop.f32.mrb[0].mxu0
    %v890 = vpop.f32.mrb[0].mxu0
    %v891 = vadd.f32 %v635, %v890
    %v892 = vpop.f32.mrb[0].mxu0
    %893 = vmatprep.mubr.bf16.mxu0 0
    %894 = vmatmul.mubr.bf16.gmra.mrb[0].mxu0 %v799
    %v895 = vpop.f32.mrb[0].mxu0
    %v896 = vadd.f32 %v640, %v895
    %v897 = vpop.f32.mrb[0].mxu0
    %v898 = vpop.f32.mrb[0].mxu0
    %v899 = vadd.f32 %v645, %v898
    %v900 = vpop.f32.mrb[0].mxu0
    %901 = vmatprep.mubr.bf16.mxu0 0
    %902 = vmatmul.mubr.bf16.gmra.mrb[0].mxu0 %v802
    %v903 = vpop.f32.mrb[0].mxu0
    %v904 = vadd.f32 %v650, %v903
    %v905 = vpop.f32.mrb[0].mxu0
    %v906 = vpop.f32.mrb[0].mxu0
    %v907 = vadd.f32 %v655, %v906
    %v908 = vpop.f32.mrb[0].mxu0
    %909 = vmatprep.mubr.bf16.mxu0 0
    %910 = vmatmul.mubr.bf16.gmra.mrb[0].mxu0 %v805
    %v911 = vpop.f32.mrb[0].mxu0
    %v912 = vadd.f32 %v660, %v911
    %v913 = vpop.f32.mrb[0].mxu0
    %v914 = vpop.f32.mrb[0].mxu0
    %v915 = vadd.f32 %v665, %v914
    %v916 = vpop.f32.mrb[0].mxu0
    %917 = vmatprep.mubr.bf16.mxu0 0
    %918 = vmatmul.mubr.bf16.gmra.mrb[0].mxu0 %v808
    %v919 = vpop.f32.mrb[0].mxu0
    %v920 = vadd.f32 %v670, %v919
    %v921 = vpop.f32.mrb[0].mxu0
    %v922 = vpop.f32.mrb[0].mxu0
    %v923 = vadd.f32 %v675, %v922
    %v924 = vpop.f32.mrb[0].mxu0
    %925 = vmatprep.mubr.bf16.mxu0 0
    %926 = vmatmul.mubr.bf16.gmra.mrb[0].mxu0 %v811
    %v927 = vpop.f32.mrb[0].mxu0
    %v928 = vadd.f32 %v680, %v927
    %v929 = vpop.f32.mrb[0].mxu0
    %v930 = vpop.f32.mrb[0].mxu0
    %v931 = vadd.f32 %v685, %v930
    %v932 = vpop.f32.mrb[0].mxu0
    %933 = vmatprep.mubr.bf16.mxu0 0
    %934 = vmatmul.mubr.bf16.gmra.mrb[0].mxu0 %v814
    %v935 = vpop.f32.mrb[0].mxu0
    %v936 = vadd.f32 %v690, %v935
    %v937 = vpop.f32.mrb[0].mxu0
    %v938 = vpop.f32.mrb[0].mxu0
    %v939 = vadd.f32 %v695, %v938
    %v940 = vpop.f32.mrb[0].mxu0
    %941 = vmatprep.mubr.bf16.mxu0 0
    %942 = vmatmul.mubr.bf16.gmra.mrb[0].mxu0 %v817
    %v943 = vpop.f32.mrb[0].mxu0
    %v944 = vadd.f32 %v700, %v943
    %v945 = vpop.f32.mrb[0].mxu0
    %v946 = vpop.f32.mrb[0].mxu0
    %v947 = vadd.f32 %v705, %v946
    %v948 = vpop.f32.mrb[0].mxu0
    %949 = vmatprep.mubr.bf16.mxu0 0
    %950 = vmatmul.mubr.bf16.gmra.mrb[0].mxu0 %v820
    %v951 = vpop.f32.mrb[0].mxu0
    %v952 = vadd.f32 %v710, %v951
    %v953 = vpop.f32.mrb[0].mxu0
    %v954 = vpop.f32.mrb[0].mxu0
    %v955 = vadd.f32 %v715, %v954
    %v956 = vpop.f32.mrb[0].mxu0
    %957 = vmatprep.mubr.bf16.mxu0 0
    %958 = vmatmul.mubr.bf16.gmra.mrb[0].mxu0 %v823
    %v959 = vpop.f32.mrb[0].mxu0
    %v960 = vadd.f32 %v720, %v959
    %v961 = vpop.f32.mrb[0].mxu0
    %v962 = vpop.f32.mrb[0].mxu0
    %v963 = vpop.f32.mrb[0].mxu0
    %964 = vdwg.mxu0
    %v965 = vmax.f32 %v864, 0.0
    %v966 = vmax.f32 %v867, 0.0
    %v967 = vmax.f32 %v872, 0.0
    %v968 = vmax.f32 %v875, 0.0
    %v969 = vmax.f32 %v880, 0.0
    %v970 = vmax.f32 %v883, 0.0
    %v971 = vmax.f32 %v888, 0.0
    %v972 = vmax.f32 %v891, 0.0
    %v973 = vmax.f32 %v896, 0.0
    %v974 = vmax.f32 %v899, 0.0
    %v975 = vmax.f32 %v904, 0.0
    %v976 = vmax.f32 %v907, 0.0
    %v977 = vmax.f32 %v912, 0.0
    %v978 = vmax.f32 %v915, 0.0
    %v979 = vmax.f32 %v920, 0.0
    %v980 = vmax.f32 %v923, 0.0
    %v981 = vmax.f32 %v928, 0.0
    %v982 = vmax.f32 %v931, 0.0
    %v983 = vmax.f32 %v936, 0.0
    %v984 = vmax.f32 %v939, 0.0
    %v985 = vmax.f32 %v944, 0.0
    %v986 = vmax.f32 %v947, 0.0
    %v987 = vmax.f32 %v952, 0.0
    %v988 = vmax.f32 %v955, 0.0
    %v989 = vmax.f32 %v960, 0.0
    %v990 = vld [vmem:[%s7] sm:$0xff]
    %v991 = vld [vmem:[%s7 + $0x8] sm:$0xff]
    %v992 = vld [vmem:[%s7 + $0x10] sm:$0xff]
    %v993 = vld [vmem:[%s7 + $0x18] sm:$0xff]
    %v994 = vld [vmem:[%s7 + $0x20] sm:$0xff]
    %v995 = vld [vmem:[%s7 + $0x28] sm:$0xff]
    %v996 = vld [vmem:[%s7 + $0x30] sm:$0xff]
    %v997 = vld [vmem:[%s7 + $0x38] sm:$0xff]
    %v998 = vld [vmem:[%s7 + $0x40] sm:$0xff]
    %v999 = vld [vmem:[%s7 + $0x48] sm:$0xff]
    %v1000 = vld [vmem:[%s7 + $0x50] sm:$0xff]
    %v1001 = vld [vmem:[%s7 + $0x58] sm:$0xff]
    %v1002 = vld [vmem:[%s7 + $0x60] sm:$0xff]
    %v1003 = vld [vmem:[%s7 + $0x68] sm:$0xff]
    %v1004 = vld [vmem:[%s7 + $0x70] sm:$0xff]
    %v1005 = vld [vmem:[%s7 + $0x78] sm:$0xff]
    %v1006 = vld [vmem:[%s7 + $0x80] sm:$0xff]
    %v1007 = vld [vmem:[%s7 + $0x88] sm:$0xff]
    %v1008 = vld [vmem:[%s7 + $0x90] sm:$0xff]
    %v1009 = vld [vmem:[%s7 + $0x98] sm:$0xff]
    %v1010 = vld [vmem:[%s7 + $0xa0] sm:$0xff]
    %v1011 = vld [vmem:[%s7 + $0xa8] sm:$0xff]
    %v1012 = vld [vmem:[%s7 + $0xb0] sm:$0xff]
    %v1013 = vld [vmem:[%s7 + $0xb8] sm:$0xff]
    %v1014 = vld [vmem:[%s7 + $0xc0] sm:$0xff]
    %v1015 = vpack.c.bf16 %v966, %v965
    %v1016 = vpack.c.bf16 %v968, %v967
    %v1017 = vpack.c.bf16 %v970, %v969
    %v1018 = vpack.c.bf16 %v972, %v971
    %v1019 = vpack.c.bf16 %v974, %v973
    %v1020 = vpack.c.bf16 %v976, %v975
    %v1021 = vpack.c.bf16 %v978, %v977
    %v1022 = vpack.c.bf16 %v980, %v979
    %v1023 = vpack.c.bf16 %v982, %v981
    %v1024 = vpack.c.bf16 %v984, %v983
    %v1025 = vpack.c.bf16 %v986, %v985
    %v1026 = vpack.c.bf16 %v988, %v987
    %v1027 = vpack.c.bf16 %v989, %v989
    %v1028 = vld [vmem:[%s8] sm:$0xff]
    %v1029 = vld [vmem:[%s8 + $0x8] sm:$0xff]
    %v1030 = vld [vmem:[%s8 + $0x10] sm:$0xff]
    %v1031 = vld [vmem:[%s8 + $0x18] sm:$0xff]
    %v1032 = vld [vmem:[%s8 + $0x20] sm:$0xff]
    %v1033 = vld [vmem:[%s8 + $0x28] sm:$0xff]
    %v1034 = vld [vmem:[%s8 + $0x30] sm:$0xff]
    %v1035 = vld [vmem:[%s8 + $0x38] sm:$0xff]
    %v1036 = vld [vmem:[%s8 + $0x40] sm:$0xff]
    %v1037 = vld [vmem:[%s8 + $0x48] sm:$0xff]
    %v1038 = vld [vmem:[%s8 + $0x50] sm:$0xff]
    %v1039 = vld [vmem:[%s8 + $0x58] sm:$0xff]
    %v1040 = vld [vmem:[%s8 + $0x60] sm:$0xff]
    %v1041 = vld [vmem:[%s8 + $0x68] sm:$0xff]
    %v1042 = vld [vmem:[%s8 + $0x70] sm:$0xff]
    %v1043 = vld [vmem:[%s8 + $0x78] sm:$0xff]
    %v1044 = vld [vmem:[%s8 + $0x80] sm:$0xff]
    %v1045 = vld [vmem:[%s8 + $0x88] sm:$0xff]
    %v1046 = vld [vmem:[%s8 + $0x90] sm:$0xff]
    %v1047 = vld [vmem:[%s8 + $0x98] sm:$0xff]
    %v1048 = vld [vmem:[%s8 + $0xa0] sm:$0xff]
    %v1049 = vld [vmem:[%s8 + $0xa8] sm:$0xff]
    %v1050 = vld [vmem:[%s8 + $0xb0] sm:$0xff]
    %v1051 = vld [vmem:[%s8 + $0xb8] sm:$0xff]
    %v1052 = vld [vmem:[%s8 + $0xc0] sm:$0xff]
    %1054 = vset.pattern.permute.xlu0 0
    %1055 = vperm.xlu0 %1054, %v1028
    %v1056 = vpop.permute.xlu0 %1055
    %1059 = vset.pattern.permute.xlu0 0
    %1060 = vperm.xlu0 %1059, %v1029
    %v1061 = vpop.permute.xlu0 %1060
    %1064 = vset.pattern.permute.xlu0 0
    %1065 = vperm.xlu0 %1064, %v1030
    %v1066 = vpop.permute.xlu0 %1065
    %1069 = vset.pattern.permute.xlu0 0
    %1070 = vperm.xlu0 %1069, %v1031
    %v1071 = vpop.permute.xlu0 %1070
    %1074 = vset.pattern.permute.xlu0 0
    %1075 = vperm.xlu0 %1074, %v1032
    %v1076 = vpop.permute.xlu0 %1075
    %1079 = vset.pattern.permute.xlu0 0
    %1080 = vperm.xlu0 %1079, %v1033
    %v1081 = vpop.permute.xlu0 %1080
    %1084 = vset.pattern.permute.xlu0 0
    %1085 = vperm.xlu0 %1084, %v1034
    %v1086 = vpop.permute.xlu0 %1085
    %1089 = vset.pattern.permute.xlu0 0
    %1090 = vperm.xlu0 %1089, %v1035
    %v1091 = vpop.permute.xlu0 %1090
    %1094 = vset.pattern.permute.xlu0 0
    %1095 = vperm.xlu0 %1094, %v1036
    %v1096 = vpop.permute.xlu0 %1095
    %1099 = vset.pattern.permute.xlu0 0
    %1100 = vperm.xlu0 %1099, %v1037
    %v1101 = vpop.permute.xlu0 %1100
    %1104 = vset.pattern.permute.xlu0 0
    %1105 = vperm.xlu0 %1104, %v1038
    %v1106 = vpop.permute.xlu0 %1105
    %1109 = vset.pattern.permute.xlu0 0
    %1110 = vperm.xlu0 %1109, %v1039
    %v1111 = vpop.permute.xlu0 %1110
    %1114 = vset.pattern.permute.xlu0 0
    %1115 = vperm.xlu0 %1114, %v1040
    %v1116 = vpop.permute.xlu0 %1115
    %1119 = vset.pattern.permute.xlu0 0
    %1120 = vperm.xlu0 %1119, %v1041
    %v1121 = vpop.permute.xlu0 %1120
    %1124 = vset.pattern.permute.xlu0 0
    %1125 = vperm.xlu0 %1124, %v1042
    %v1126 = vpop.permute.xlu0 %1125
    %1129 = vset.pattern.permute.xlu0 0
    %1130 = vperm.xlu0 %1129, %v1043
    %v1131 = vpop.permute.xlu0 %1130
    %1134 = vset.pattern.permute.xlu0 0
    %1135 = vperm.xlu0 %1134, %v1044
    %v1136 = vpop.permute.xlu0 %1135
    %1139 = vset.pattern.permute.xlu0 0
    %1140 = vperm.xlu0 %1139, %v1045
    %v1141 = vpop.permute.xlu0 %1140
    %1144 = vset.pattern.permute.xlu0 0
    %1145 = vperm.xlu0 %1144, %v1046
    %v1146 = vpop.permute.xlu0 %1145
    %1149 = vset.pattern.permute.xlu0 0
    %1150 = vperm.xlu0 %1149, %v1047
    %v1151 = vpop.permute.xlu0 %1150
    %1154 = vset.pattern.permute.xlu0 0
    %1155 = vperm.xlu0 %1154, %v1048
    %v1156 = vpop.permute.xlu0 %1155
    %1159 = vset.pattern.permute.xlu0 0
    %1160 = vperm.xlu0 %1159, %v1049
    %v1161 = vpop.permute.xlu0 %1160
    %1164 = vset.pattern.permute.xlu0 0
    %1165 = vperm.xlu0 %1164, %v1050
    %v1166 = vpop.permute.xlu0 %1165
    %1169 = vset.pattern.permute.xlu0 0
    %1170 = vperm.xlu0 %1169, %v1051
    %v1171 = vpop.permute.xlu0 %1170
    %1174 = vset.pattern.permute.xlu0 0
    %1175 = vperm.xlu0 %1174, %v1052
    %v1176 = vpop.permute.xlu0 %1175
    %v1203 = vunpack.c.l.b16 %v990
    %v1204 = vunpack.c.h.b16 %v990
    %v1205 = vunpack.c.l.b16 %v991
    %v1206 = vunpack.c.h.b16 %v991
    %v1207 = vunpack.c.l.b16 %v992
    %v1208 = vunpack.c.h.b16 %v992
    %v1209 = vunpack.c.l.b16 %v993
    %v1210 = vunpack.c.h.b16 %v993
    %v1211 = vunpack.c.l.b16 %v994
    %v1212 = vunpack.c.h.b16 %v994
    %v1213 = vunpack.c.l.b16 %v995
    %v1214 = vunpack.c.h.b16 %v995
    %v1215 = vunpack.c.l.b16 %v996
    %v1216 = vunpack.c.h.b16 %v996
    %v1217 = vunpack.c.l.b16 %v997
    %v1218 = vunpack.c.h.b16 %v997
    %v1219 = vunpack.c.l.b16 %v998
    %v1220 = vunpack.c.h.b16 %v998
    %v1221 = vunpack.c.l.b16 %v999
    %v1222 = vunpack.c.h.b16 %v999
    %v1223 = vunpack.c.l.b16 %v1000
    %v1224 = vunpack.c.h.b16 %v1000
    %v1225 = vunpack.c.l.b16 %v1001
    %v1226 = vunpack.c.h.b16 %v1001
    %v1227 = vunpack.c.l.b16 %v1002
    %v1228 = vunpack.c.h.b16 %v1002
    %v1229 = vunpack.c.l.b16 %v1003
    %v1230 = vunpack.c.h.b16 %v1003
    %v1231 = vunpack.c.l.b16 %v1004
    %v1232 = vunpack.c.h.b16 %v1004
    %v1233 = vunpack.c.l.b16 %v1005
    %v1234 = vunpack.c.h.b16 %v1005
    %v1235 = vunpack.c.l.b16 %v1006
    %v1236 = vunpack.c.h.b16 %v1006
    %v1237 = vunpack.c.l.b16 %v1007
    %v1238 = vunpack.c.h.b16 %v1007
    %v1239 = vunpack.c.l.b16 %v1008
    %v1240 = vunpack.c.h.b16 %v1008
    %v1241 = vunpack.c.l.b16 %v1009
    %v1242 = vunpack.c.h.b16 %v1009
    %v1243 = vunpack.c.l.b16 %v1010
    %v1244 = vunpack.c.h.b16 %v1010
    %v1245 = vunpack.c.l.b16 %v1011
    %v1246 = vunpack.c.h.b16 %v1011
    %v1247 = vunpack.c.l.b16 %v1012
    %v1248 = vunpack.c.h.b16 %v1012
    %v1249 = vunpack.c.l.b16 %v1013
    %v1250 = vunpack.c.h.b16 %v1013
    %v1251 = vunpack.c.l.b16 %v1014
    %v1252 = vunpack.c.h.b16 %v1014
    %v1253 = vpack.c.b16 %v1205, %v1203
    %v1254 = vpack.c.b16 %v1206, %v1204
    %v1255 = vpack.c.b16 %v1209, %v1207
    %v1256 = vpack.c.b16 %v1210, %v1208
    %v1257 = vpack.c.b16 %v1213, %v1211
    %v1258 = vpack.c.b16 %v1214, %v1212
    %v1259 = vpack.c.b16 %v1217, %v1215
    %v1260 = vpack.c.b16 %v1218, %v1216
    %v1261 = vpack.c.b16 %v1221, %v1219
    %v1262 = vpack.c.b16 %v1222, %v1220
    %v1263 = vpack.c.b16 %v1225, %v1223
    %v1264 = vpack.c.b16 %v1226, %v1224
    %v1265 = vpack.c.b16 %v1229, %v1227
    %v1266 = vpack.c.b16 %v1230, %v1228
    %v1267 = vpack.c.b16 %v1233, %v1231
    %v1268 = vpack.c.b16 %v1234, %v1232
    %v1269 = vpack.c.b16 %v1237, %v1235
    %v1270 = vpack.c.b16 %v1238, %v1236
    %v1271 = vpack.c.b16 %v1241, %v1239
    %v1272 = vpack.c.b16 %v1242, %v1240
    %v1273 = vpack.c.b16 %v1245, %v1243
    %v1274 = vpack.c.b16 %v1246, %v1244
    %v1275 = vpack.c.b16 %v1249, %v1247
    %v1276 = vpack.c.b16 %v1250, %v1248
    %v1277 = vpack.c.b16 %v1251, %v1251
    %v1278 = vpack.c.b16 %v1252, %v1252
    %vm1292 = vcmask 588800
    %v1294 = vsel %vm1292, %v1254, 0
    %v1297 = vsel %vm1292, %v1256, 0
    %v1300 = vsel %vm1292, %v1258, 0
    %v1303 = vsel %vm1292, %v1260, 0
    %v1306 = vsel %vm1292, %v1262, 0
    %v1309 = vsel %vm1292, %v1264, 0
    %v1312 = vsel %vm1292, %v1266, 0
    %v1315 = vsel %vm1292, %v1268, 0
    %v1318 = vsel %vm1292, %v1270, 0
    %v1321 = vsel %vm1292, %v1272, 0
    %v1324 = vsel %vm1292, %v1274, 0
    %v1327 = vsel %vm1292, %v1276, 0
    %v1330 = vsel %vm1292, %v1278, 0
    %vm1332 = vcmask 1043456
    %v1334 = vsel %vm1332, %v1027, 0
    %1336 = vmatprep.subr.bf16.mxu0 0
    %1337 = vmatpush1.bf16.msra.mxu0 %v1015
    %1338 = vmatprep.subr.bf16.mxu0 0
    %1339 = vmatpush1.bf16.msra.mxu0 %v1016
    %1340 = vmatprep.subr.bf16.mxu0 0
    %1341 = vmatpush1.bf16.msra.mxu0 %v1017
    %1342 = vmatprep.subr.bf16.mxu0 0
    %1343 = vmatpush1.bf16.msra.mxu0 %v1018
    %1344 = vmatprep.subr.bf16.mxu0 0
    %1345 = vmatpush1.bf16.msra.mxu0 %v1019
    %1346 = vmatprep.subr.bf16.mxu0 0
    %1347 = vmatpush1.bf16.msra.mxu0 %v1020
    %1348 = vmatprep.subr.bf16.mxu0 0
    %1349 = vmatpush1.bf16.msra.mxu0 %v1021
    %1350 = vmatprep.subr.bf16.mxu0 0
    %1351 = vmatpush1.bf16.msra.mxu0 %v1022
    %1352 = vmatprep.subr.bf16.mxu0 0
    %1353 = vmatpush1.bf16.msra.mxu0 %v1023
    %1354 = vmatprep.subr.bf16.mxu0 0
    %1355 = vmatpush1.bf16.msra.mxu0 %v1024
    %1356 = vmatprep.subr.bf16.mxu0 0
    %1357 = vmatpush1.bf16.msra.mxu0 %v1025
    %1358 = vmatprep.subr.bf16.mxu0 0
    %1359 = vmatpush1.bf16.msra.mxu0 %v1026
    %1360 = vmatprep.subr.bf16.mxu0 0
    %1361 = vmatpush1.bf16.msra.mxu0 %v1334
    %1362 = vmatprep.subr.bf16.mxu0 0
    %1363 = vmatpush1.bf16.msra.mxu0 0
    %1364 = vmatprep.subr.bf16.mxu0 0
    %1365 = vmatpush1.bf16.msra.mxu0 0
    %1366 = vmatprep.subr.bf16.mxu0 0
    %1367 = vmatpush1.bf16.msra.mxu0 0
    %1368 = vmatprep.mubr.bf16.mxu0 %v1294
    %1369 = vmatmul.mubr.bf16.gmra.mrb[0].mxu0 %v1253
    %v1370 = vpop.f32.mrb[0].mxu0
    %v1371 = vadd.f32 %v1056, %v1370
    %v1372 = vpop.f32.mrb[0].mxu0
    %v1373 = vpop.f32.mrb[0].mxu0
    %v1374 = vadd.f32 %v1061, %v1373
    %v1375 = vpop.f32.mrb[0].mxu0
    %1376 = vmatprep.mubr.bf16.mxu0 %v1297
    %1377 = vmatmul.mubr.bf16.gmra.mrb[0].mxu0 %v1255
    %v1378 = vpop.f32.mrb[0].mxu0
    %v1379 = vadd.f32 %v1066, %v1378
    %v1380 = vpop.f32.mrb[0].mxu0
    %v1381 = vpop.f32.mrb[0].mxu0
    %v1382 = vadd.f32 %v1071, %v1381
    %v1383 = vpop.f32.mrb[0].mxu0
    %1384 = vmatprep.mubr.bf16.mxu0 %v1300
    %1385 = vmatmul.mubr.bf16.gmra.mrb[0].mxu0 %v1257
    %v1386 = vpop.f32.mrb[0].mxu0
    %v1387 = vadd.f32 %v1076, %v1386
    %v1388 = vpop.f32.mrb[0].mxu0
    %v1389 = vpop.f32.mrb[0].mxu0
    %v1390 = vadd.f32 %v1081, %v1389
    %v1391 = vpop.f32.mrb[0].mxu0
    %1392 = vmatprep.mubr.bf16.mxu0 %v1303
    %1393 = vmatmul.mubr.bf16.gmra.mrb[0].mxu0 %v1259
    %v1394 = vpop.f32.mrb[0].mxu0
    %v1395 = vadd.f32 %v1086, %v1394
    %v1396 = vpop.f32.mrb[0].mxu0
    %v1397 = vpop.f32.mrb[0].mxu0
    %v1398 = vadd.f32 %v1091, %v1397
    %v1399 = vpop.f32.mrb[0].mxu0
    %1400 = vmatprep.mubr.bf16.mxu0 %v1306
    %1401 = vmatmul.mubr.bf16.gmra.mrb[0].mxu0 %v1261
    %v1402 = vpop.f32.mrb[0].mxu0
    %v1403 = vadd.f32 %v1096, %v1402
    %v1404 = vpop.f32.mrb[0].mxu0
    %v1405 = vpop.f32.mrb[0].mxu0
    %v1406 = vadd.f32 %v1101, %v1405
    %v1407 = vpop.f32.mrb[0].mxu0
    %1408 = vmatprep.mubr.bf16.mxu0 %v1309
    %1409 = vmatmul.mubr.bf16.gmra.mrb[0].mxu0 %v1263
    %v1410 = vpop.f32.mrb[0].mxu0
    %v1411 = vadd.f32 %v1106, %v1410
    %v1412 = vpop.f32.mrb[0].mxu0
    %v1413 = vpop.f32.mrb[0].mxu0
    %v1414 = vadd.f32 %v1111, %v1413
    %v1415 = vpop.f32.mrb[0].mxu0
    %1416 = vmatprep.mubr.bf16.mxu0 %v1312
    %1417 = vmatmul.mubr.bf16.gmra.mrb[0].mxu0 %v1265
    %v1418 = vpop.f32.mrb[0].mxu0
    %v1419 = vadd.f32 %v1116, %v1418
    %v1420 = vpop.f32.mrb[0].mxu0
    %v1421 = vpop.f32.mrb[0].mxu0
    %v1422 = vadd.f32 %v1121, %v1421
    %v1423 = vpop.f32.mrb[0].mxu0
    %1424 = vmatprep.mubr.bf16.mxu0 %v1315
    %1425 = vmatmul.mubr.bf16.gmra.mrb[0].mxu0 %v1267
    %v1426 = vpop.f32.mrb[0].mxu0
    %v1427 = vadd.f32 %v1126, %v1426
    %v1428 = vpop.f32.mrb[0].mxu0
    %v1429 = vpop.f32.mrb[0].mxu0
    %v1430 = vadd.f32 %v1131, %v1429
    %v1431 = vpop.f32.mrb[0].mxu0
    %1432 = vmatprep.mubr.bf16.mxu0 %v1318
    %1433 = vmatmul.mubr.bf16.gmra.mrb[0].mxu0 %v1269
    %v1434 = vpop.f32.mrb[0].mxu0
    %v1435 = vadd.f32 %v1136, %v1434
    %v1436 = vpop.f32.mrb[0].mxu0
    %v1437 = vpop.f32.mrb[0].mxu0
    %v1438 = vadd.f32 %v1141, %v1437
    %v1439 = vpop.f32.mrb[0].mxu0
    %1440 = vmatprep.mubr.bf16.mxu0 %v1321
    %1441 = vmatmul.mubr.bf16.gmra.mrb[0].mxu0 %v1271
    %v1442 = vpop.f32.mrb[0].mxu0
    %v1443 = vadd.f32 %v1146, %v1442
    %v1444 = vpop.f32.mrb[0].mxu0
    %v1445 = vpop.f32.mrb[0].mxu0
    %v1446 = vadd.f32 %v1151, %v1445
    %v1447 = vpop.f32.mrb[0].mxu0
    %1448 = vmatprep.mubr.bf16.mxu0 %v1324
    %1449 = vmatmul.mubr.bf16.gmra.mrb[0].mxu0 %v1273
    %v1450 = vpop.f32.mrb[0].mxu0
    %v1451 = vadd.f32 %v1156, %v1450
    %v1452 = vpop.f32.mrb[0].mxu0
    %v1453 = vpop.f32.mrb[0].mxu0
    %v1454 = vadd.f32 %v1161, %v1453
    %v1455 = vpop.f32.mrb[0].mxu0
    %1456 = vmatprep.mubr.bf16.mxu0 %v1327
    %1457 = vmatmul.mubr.bf16.gmra.mrb[0].mxu0 %v1275
    %v1458 = vpop.f32.mrb[0].mxu0
    %v1459 = vadd.f32 %v1166, %v1458
    %v1460 = vpop.f32.mrb[0].mxu0
    %v1461 = vpop.f32.mrb[0].mxu0
    %v1462 = vadd.f32 %v1171, %v1461
    %v1463 = vpop.f32.mrb[0].mxu0
    %1464 = vmatprep.mubr.bf16.mxu0 %v1330
    %1465 = vmatmul.mubr.bf16.gmra.mrb[0].mxu0 %v1277
    %v1466 = vpop.f32.mrb[0].mxu0
    %v1467 = vadd.f32 %v1176, %v1466
    %v1468 = vpop.f32.mrb[0].mxu0
    %v1469 = vpop.f32.mrb[0].mxu0
    %v1470 = vpop.f32.mrb[0].mxu0
    %1471 = vdwg.mxu0
    %v1472 = vmax.f32 %v1371, 0.0
    %v1473 = vmax.f32 %v1374, 0.0
    %v1474 = vmax.f32 %v1379, 0.0
    %v1475 = vmax.f32 %v1382, 0.0
    %v1476 = vmax.f32 %v1387, 0.0
    %v1477 = vmax.f32 %v1390, 0.0
    %v1478 = vmax.f32 %v1395, 0.0
    %v1479 = vmax.f32 %v1398, 0.0
    %v1480 = vmax.f32 %v1403, 0.0
    %v1481 = vmax.f32 %v1406, 0.0
    %v1482 = vmax.f32 %v1411, 0.0
    %v1483 = vmax.f32 %v1414, 0.0
    %v1484 = vmax.f32 %v1419, 0.0
    %v1485 = vmax.f32 %v1422, 0.0
    %v1486 = vmax.f32 %v1427, 0.0
    %v1487 = vmax.f32 %v1430, 0.0
    %v1488 = vmax.f32 %v1435, 0.0
    %v1489 = vmax.f32 %v1438, 0.0
    %v1490 = vmax.f32 %v1443, 0.0
    %v1491 = vmax.f32 %v1446, 0.0
    %v1492 = vmax.f32 %v1451, 0.0
    %v1493 = vmax.f32 %v1454, 0.0
    %v1494 = vmax.f32 %v1459, 0.0
    %v1495 = vmax.f32 %v1462, 0.0
    %v1496 = vmax.f32 %v1467, 0.0
    %v1497 = vld [vmem:[%s9] sm:$0xff]
    %v1498 = vld [vmem:[%s9 + $0x8] sm:$0xff]
    %v1499 = vld [vmem:[%s9 + $0x10] sm:$0xff]
    %v1500 = vld [vmem:[%s9 + $0x18] sm:$0xff]
    %v1501 = vld [vmem:[%s9 + $0x20] sm:$0xff]
    %v1502 = vld [vmem:[%s9 + $0x28] sm:$0xff]
    %v1503 = vld [vmem:[%s9 + $0x30] sm:$0xff]
    %v1504 = vld [vmem:[%s9 + $0x38] sm:$0xff]
    %v1505 = vld [vmem:[%s9 + $0x40] sm:$0xff]
    %v1506 = vld [vmem:[%s9 + $0x48] sm:$0xff]
    %v1507 = vld [vmem:[%s9 + $0x50] sm:$0xff]
    %v1508 = vld [vmem:[%s9 + $0x58] sm:$0xff]
    %v1509 = vld [vmem:[%s9 + $0x60] sm:$0x33]
    %v1510 = vpack.c.bf16 %v1473, %v1472
    %v1511 = vpack.c.bf16 %v1475, %v1474
    %v1512 = vpack.c.bf16 %v1477, %v1476
    %v1513 = vpack.c.bf16 %v1479, %v1478
    %v1514 = vpack.c.bf16 %v1481, %v1480
    %v1515 = vpack.c.bf16 %v1483, %v1482
    %v1516 = vpack.c.bf16 %v1485, %v1484
    %v1517 = vpack.c.bf16 %v1487, %v1486
    %v1518 = vpack.c.bf16 %v1489, %v1488
    %v1519 = vpack.c.bf16 %v1491, %v1490
    %v1520 = vpack.c.bf16 %v1493, %v1492
    %v1521 = vpack.c.bf16 %v1495, %v1494
    %v1522 = vpack.c.bf16 %v1496, %v1496
    %v1523 = vld [vmem:[%s10] sm:$0xff]
    %v1524 = vld [vmem:[%s10 + $0x8] sm:$0xff]
    %v1525 = vld [vmem:[%s10 + $0x10] sm:$0xff]
    %v1526 = vld [vmem:[%s10 + $0x18] sm:$0xff]
    %v1527 = vld [vmem:[%s10 + $0x20] sm:$0xff]
    %v1528 = vld [vmem:[%s10 + $0x28] sm:$0xff]
    %v1529 = vld [vmem:[%s10 + $0x30] sm:$0xff]
    %v1530 = vld [vmem:[%s10 + $0x38] sm:$0xff]
    %v1531 = vld [vmem:[%s10 + $0x40] sm:$0xff]
    %v1532 = vld [vmem:[%s10 + $0x48] sm:$0xff]
    %v1533 = vld [vmem:[%s10 + $0x50] sm:$0xff]
    %v1534 = vld [vmem:[%s10 + $0x58] sm:$0xff]
    %v1535 = vld [vmem:[%s10 + $0x60] sm:$0xf]
    %1537 = vset.pattern.permute.xlu0 0
    %1538 = vperm.xlu0 %1537, %v1523
    %v1539 = vpop.permute.xlu0 %1538
    %1542 = vset.pattern.permute.xlu0 0
    %1543 = vperm.xlu0 %1542, %v1524
    %v1544 = vpop.permute.xlu0 %1543
    %1547 = vset.pattern.permute.xlu0 0
    %1548 = vperm.xlu0 %1547, %v1525
    %v1549 = vpop.permute.xlu0 %1548
    %1552 = vset.pattern.permute.xlu0 0
    %1553 = vperm.xlu0 %1552, %v1526
    %v1554 = vpop.permute.xlu0 %1553
    %1557 = vset.pattern.permute.xlu0 0
    %1558 = vperm.xlu0 %1557, %v1527
    %v1559 = vpop.permute.xlu0 %1558
    %1562 = vset.pattern.permute.xlu0 0
    %1563 = vperm.xlu0 %1562, %v1528
    %v1564 = vpop.permute.xlu0 %1563
    %1567 = vset.pattern.permute.xlu0 0
    %1568 = vperm.xlu0 %1567, %v1529
    %v1569 = vpop.permute.xlu0 %1568
    %1572 = vset.pattern.permute.xlu0 0
    %1573 = vperm.xlu0 %1572, %v1530
    %v1574 = vpop.permute.xlu0 %1573
    %1577 = vset.pattern.permute.xlu0 0
    %1578 = vperm.xlu0 %1577, %v1531
    %v1579 = vpop.permute.xlu0 %1578
    %1582 = vset.pattern.permute.xlu0 0
    %1583 = vperm.xlu0 %1582, %v1532
    %v1584 = vpop.permute.xlu0 %1583
    %1587 = vset.pattern.permute.xlu0 0
    %1588 = vperm.xlu0 %1587, %v1533
    %v1589 = vpop.permute.xlu0 %1588
    %1592 = vset.pattern.permute.xlu0 0
    %1593 = vperm.xlu0 %1592, %v1534
    %v1594 = vpop.permute.xlu0 %1593
    %1597 = vset.pattern.permute.xlu0 0
    %1598 = vperm.xlu0 %1597, %v1535
    %v1599 = vpop.permute.xlu0 %1598
    %v1614 = vunpack.c.l.b16 %v1497
    %v1615 = vunpack.c.h.b16 %v1497
    %v1616 = vunpack.c.l.b16 %v1498
    %v1617 = vunpack.c.h.b16 %v1498
    %v1618 = vunpack.c.l.b16 %v1499
    %v1619 = vunpack.c.h.b16 %v1499
    %v1620 = vunpack.c.l.b16 %v1500
    %v1621 = vunpack.c.h.b16 %v1500
    %v1622 = vunpack.c.l.b16 %v1501
    %v1623 = vunpack.c.h.b16 %v1501
    %v1624 = vunpack.c.l.b16 %v1502
    %v1625 = vunpack.c.h.b16 %v1502
    %v1626 = vunpack.c.l.b16 %v1503
    %v1627 = vunpack.c.h.b16 %v1503
    %v1628 = vunpack.c.l.b16 %v1504
    %v1629 = vunpack.c.h.b16 %v1504
    %v1630 = vunpack.c.l.b16 %v1505
    %v1631 = vunpack.c.h.b16 %v1505
    %v1632 = vunpack.c.l.b16 %v1506
    %v1633 = vunpack.c.h.b16 %v1506
    %v1634 = vunpack.c.l.b16 %v1507
    %v1635 = vunpack.c.h.b16 %v1507
    %v1636 = vunpack.c.l.b16 %v1508
    %v1637 = vunpack.c.h.b16 %v1508
    %v1638 = vunpack.c.l.b16 %v1509
    %v1639 = vunpack.c.h.b16 %v1509
    %v1640 = vpack.c.b16 %v1616, %v1614
    %v1641 = vpack.c.b16 %v1617, %v1615
    %v1642 = vpack.c.b16 %v1620, %v1618
    %v1643 = vpack.c.b16 %v1621, %v1619
    %v1644 = vpack.c.b16 %v1624, %v1622
    %v1645 = vpack.c.b16 %v1625, %v1623
    %v1646 = vpack.c.b16 %v1628, %v1626
    %v1647 = vpack.c.b16 %v1629, %v1627
    %v1648 = vpack.c.b16 %v1632, %v1630
    %v1649 = vpack.c.b16 %v1633, %v1631
    %v1650 = vpack.c.b16 %v1636, %v1634
    %v1651 = vpack.c.b16 %v1637, %v1635
    %v1652 = vpack.c.b16 %v1638, %v1638
    %v1653 = vpack.c.b16 %v1639, %v1639
    %v1662 = vsel %vm1292, %v1641, 0
    %v1665 = vsel %vm1292, %v1643, 0
    %v1668 = vsel %vm1292, %v1645, 0
    %v1671 = vsel %vm1292, %v1647, 0
    %v1674 = vsel %vm1292, %v1649, 0
    %v1677 = vsel %vm1292, %v1651, 0
    %v1680 = vsel %vm1292, %v1653, 0
    %v1683 = vsel %vm1332, %v1522, 0
    %1685 = vmatprep.subr.bf16.mxu0 0
    %1686 = vmatpush1.bf16.msra.mxu0 %v1510
    %1687 = vmatprep.subr.bf16.mxu0 0
    %1688 = vmatpush1.bf16.msra.mxu0 %v1511
    %1689 = vmatprep.subr.bf16.mxu0 0
    %1690 = vmatpush1.bf16.msra.mxu0 %v1512
    %1691 = vmatprep.subr.bf16.mxu0 0
    %1692 = vmatpush1.bf16.msra.mxu0 %v1513
    %1693 = vmatprep.subr.bf16.mxu0 0
    %1694 = vmatpush1.bf16.msra.mxu0 %v1514
    %1695 = vmatprep.subr.bf16.mxu0 0
    %1696 = vmatpush1.bf16.msra.mxu0 %v1515
    %1697 = vmatprep.subr.bf16.mxu0 0
    %1698 = vmatpush1.bf16.msra.mxu0 %v1516
    %1699 = vmatprep.subr.bf16.mxu0 0
    %1700 = vmatpush1.bf16.msra.mxu0 %v1517
    %1701 = vmatprep.subr.bf16.mxu0 0
    %1702 = vmatpush1.bf16.msra.mxu0 %v1518
    %1703 = vmatprep.subr.bf16.mxu0 0
    %1704 = vmatpush1.bf16.msra.mxu0 %v1519
    %1705 = vmatprep.subr.bf16.mxu0 0
    %1706 = vmatpush1.bf16.msra.mxu0 %v1520
    %1707 = vmatprep.subr.bf16.mxu0 0
    %1708 = vmatpush1.bf16.msra.mxu0 %v1521
    %1709 = vmatprep.subr.bf16.mxu0 0
    %1710 = vmatpush1.bf16.msra.mxu0 %v1683
    %1711 = vmatprep.subr.bf16.mxu0 0
    %1712 = vmatpush1.bf16.msra.mxu0 0
    %1713 = vmatprep.subr.bf16.mxu0 0
    %1714 = vmatpush1.bf16.msra.mxu0 0
    %1715 = vmatprep.subr.bf16.mxu0 0
    %1716 = vmatpush1.bf16.msra.mxu0 0
    %1717 = vmatprep.mubr.bf16.mxu0 %v1662
    %1718 = vmatmul.mubr.bf16.gmra.mrb[0].mxu0 %v1640
    %v1719 = vpop.f32.mrb[0].mxu0
    %v1720 = vadd.f32 %v1539, %v1719
    %v1721 = vpop.f32.mrb[0].mxu0
    %v1722 = vpop.f32.mrb[0].mxu0
    %v1723 = vadd.f32 %v1544, %v1722
    %v1724 = vpop.f32.mrb[0].mxu0
    %1725 = vmatprep.mubr.bf16.mxu0 %v1665
    %1726 = vmatmul.mubr.bf16.gmra.mrb[0].mxu0 %v1642
    %v1727 = vpop.f32.mrb[0].mxu0
    %v1728 = vadd.f32 %v1549, %v1727
    %v1729 = vpop.f32.mrb[0].mxu0
    %v1730 = vpop.f32.mrb[0].mxu0
    %v1731 = vadd.f32 %v1554, %v1730
    %v1732 = vpop.f32.mrb[0].mxu0
    %1733 = vmatprep.mubr.bf16.mxu0 %v1668
    %1734 = vmatmul.mubr.bf16.gmra.mrb[0].mxu0 %v1644
    %v1735 = vpop.f32.mrb[0].mxu0
    %v1736 = vadd.f32 %v1559, %v1735
    %v1737 = vpop.f32.mrb[0].mxu0
    %v1738 = vpop.f32.mrb[0].mxu0
    %v1739 = vadd.f32 %v1564, %v1738
    %v1740 = vpop.f32.mrb[0].mxu0
    %1741 = vmatprep.mubr.bf16.mxu0 %v1671
    %1742 = vmatmul.mubr.bf16.gmra.mrb[0].mxu0 %v1646
    %v1743 = vpop.f32.mrb[0].mxu0
    %v1744 = vadd.f32 %v1569, %v1743
    %v1745 = vpop.f32.mrb[0].mxu0
    %v1746 = vpop.f32.mrb[0].mxu0
    %v1747 = vadd.f32 %v1574, %v1746
    %v1748 = vpop.f32.mrb[0].mxu0
    %1749 = vmatprep.mubr.bf16.mxu0 %v1674
    %1750 = vmatmul.mubr.bf16.gmra.mrb[0].mxu0 %v1648
    %v1751 = vpop.f32.mrb[0].mxu0
    %v1752 = vadd.f32 %v1579, %v1751
    %v1753 = vpop.f32.mrb[0].mxu0
    %v1754 = vpop.f32.mrb[0].mxu0
    %v1755 = vadd.f32 %v1584, %v1754
    %v1756 = vpop.f32.mrb[0].mxu0
    %1757 = vmatprep.mubr.bf16.mxu0 %v1677
    %1758 = vmatmul.mubr.bf16.gmra.mrb[0].mxu0 %v1650
    %v1759 = vpop.f32.mrb[0].mxu0
    %v1760 = vadd.f32 %v1589, %v1759
    %v1761 = vpop.f32.mrb[0].mxu0
    %v1762 = vpop.f32.mrb[0].mxu0
    %v1763 = vadd.f32 %v1594, %v1762
    %v1764 = vpop.f32.mrb[0].mxu0
    %1765 = vmatprep.mubr.bf16.mxu0 %v1680
    %1766 = vmatmul.mubr.bf16.gmra.mrb[0].mxu0 %v1652
    %v1767 = vpop.f32.mrb[0].mxu0
    %v1768 = vadd.f32 %v1599, %v1767
    %v1769 = vpop.f32.mrb[0].mxu0
    %v1770 = vpop.f32.mrb[0].mxu0
    %v1771 = vpop.f32.mrb[0].mxu0
    %1772 = vdwg.mxu0
    %v1773 = vmax.f32 %v1720, 0.0
    %v1774 = vmax.f32 %v1723, 0.0
    %v1775 = vmax.f32 %v1728, 0.0
    %v1776 = vmax.f32 %v1731, 0.0
    %v1777 = vmax.f32 %v1736, 0.0
    %v1778 = vmax.f32 %v1739, 0.0
    %v1779 = vmax.f32 %v1744, 0.0
    %v1780 = vmax.f32 %v1747, 0.0
    %v1781 = vmax.f32 %v1752, 0.0
    %v1782 = vmax.f32 %v1755, 0.0
    %v1783 = vmax.f32 %v1760, 0.0
    %v1784 = vmax.f32 %v1763, 0.0
    %v1785 = vmax.f32 %v1768, 0.0
    %v1786 = vld [vmem:[%s11] sm:$0xf]
    %v1787 = vld [vmem:[%s11 + $0x4] sm:$0xf]
    %v1788 = vld [vmem:[%s11 + $0x8] sm:$0xf]
    %v1789 = vld [vmem:[%s11 + $0xc] sm:$0x7]
    %v1790 = vpack.c.bf16 %v1774, %v1773
    %v1791 = vpack.c.bf16 %v1776, %v1775
    %v1792 = vpack.c.bf16 %v1778, %v1777
    %v1793 = vpack.c.bf16 %v1780, %v1779
    %v1794 = vpack.c.bf16 %v1782, %v1781
    %v1795 = vpack.c.bf16 %v1784, %v1783
    %v1796 = vpack.c.bf16 %v1785, %v1785
    %v1797 = vld [vmem:[%s12] sm:$0xff]
    %v1798 = vld [vmem:[%s12 + $0x8] sm:$0xff]
    %v1799 = vld [vmem:[%s12 + $0x10] sm:$0xff]
    %v1800 = vld [vmem:[%s12 + $0x18] sm:$0x3f]
    %1802 = vset.pattern.permute.xlu0 0
    %1803 = vperm.xlu0 %1802, %v1797
    %v1804 = vpop.permute.xlu0 %1803
    %1807 = vset.pattern.permute.xlu0 0
    %1808 = vperm.xlu0 %1807, %v1798
    %v1809 = vpop.permute.xlu0 %1808
    %1812 = vset.pattern.permute.xlu0 0
    %1813 = vperm.xlu0 %1812, %v1799
    %v1814 = vpop.permute.xlu0 %1813
    %1817 = vset.pattern.permute.xlu0 0
    %1818 = vperm.xlu0 %1817, %v1800
    %v1819 = vpop.permute.xlu0 %1818
    %v1825 = vunpack.c.l.b16 %v1786
    %v1826 = vunpack.c.l.b16 %v1787
    %v1827 = vunpack.c.l.b16 %v1788
    %v1828 = vunpack.c.l.b16 %v1789
    %v1829 = vpack.c.b16 %v1826, %v1825
    %v1830 = vpack.c.b16 %v1828, %v1827
    %v1832 = vsel %vm785, %v1829, 0
    %v1835 = vsel %vm785, %v1830, 0
    %v1838 = vsel %vm825, %v1796, 0
    %1840 = vmatprep.subr.bf16.mxu0 0
    %1841 = vmatpush1.bf16.msra.mxu0 %v1790
    %1842 = vmatprep.subr.bf16.mxu0 0
    %1843 = vmatpush1.bf16.msra.mxu0 %v1791
    %1844 = vmatprep.subr.bf16.mxu0 0
    %1845 = vmatpush1.bf16.msra.mxu0 %v1792
    %1846 = vmatprep.subr.bf16.mxu0 0
    %1847 = vmatpush1.bf16.msra.mxu0 %v1793
    %1848 = vmatprep.subr.bf16.mxu0 0
    %1849 = vmatpush1.bf16.msra.mxu0 %v1794
    %1850 = vmatprep.subr.bf16.mxu0 0
    %1851 = vmatpush1.bf16.msra.mxu0 %v1795
    %1852 = vmatprep.subr.bf16.mxu0 0
    %1853 = vmatpush1.bf16.msra.mxu0 %v1838
    %1854 = vmatprep.subr.bf16.mxu0 0
    %1855 = vmatpush1.bf16.msra.mxu0 0
    %1856 = vmatprep.subr.bf16.mxu0 0
    %1857 = vmatpush1.bf16.msra.mxu0 0
    %1858 = vmatprep.subr.bf16.mxu0 0
    %1859 = vmatpush1.bf16.msra.mxu0 0
    %1860 = vmatprep.subr.bf16.mxu0 0
    %1861 = vmatpush1.bf16.msra.mxu0 0
    %1862 = vmatprep.subr.bf16.mxu0 0
    %1863 = vmatpush1.bf16.msra.mxu0 0
    %1864 = vmatprep.subr.bf16.mxu0 0
    %1865 = vmatpush1.bf16.msra.mxu0 0
    %1866 = vmatprep.subr.bf16.mxu0 0
    %1867 = vmatpush1.bf16.msra.mxu0 0
    %1868 = vmatprep.subr.bf16.mxu0 0
    %1869 = vmatpush1.bf16.msra.mxu0 0
    %1870 = vmatprep.subr.bf16.mxu0 0
    %1871 = vmatpush1.bf16.msra.mxu0 0
    %1872 = vmatprep.mubr.bf16.mxu0 0
    %1873 = vmatmul.mubr.bf16.gmra.mrb[0].mxu0 %v1832
    %v1874 = vpop.f32.mrb[0].mxu0
    %v1875 = vadd.f32 %v1804, %v1874
    %v1876 = vpop.f32.mrb[0].mxu0
    %v1877 = vpop.f32.mrb[0].mxu0
    %v1878 = vadd.f32 %v1809, %v1877
    %v1879 = vpop.f32.mrb[0].mxu0
    %1880 = vmatprep.mubr.bf16.mxu0 0
    %1881 = vmatmul.mubr.bf16.gmra.mrb[0].mxu0 %v1835
    %v1882 = vpop.f32.mrb[0].mxu0
    %v1883 = vadd.f32 %v1814, %v1882
    %v1884 = vpop.f32.mrb[0].mxu0
    %v1885 = vpop.f32.mrb[0].mxu0
    %v1886 = vadd.f32 %v1819, %v1885
    %v1887 = vpop.f32.mrb[0].mxu0
    %1888 = vdwg.mxu0
    %v1889 = vmax.f32 %v1875, 0.0
    %v1890 = vmax.f32 %v1878, 0.0
    %v1891 = vmax.f32 %v1883, 0.0
    %v1892 = vmax.f32 %v1886, 0.0
    %v1893 = vld [vmem:[%s13] sm:$0xff]
    %v1894 = vld [vmem:[%s13 + $0x8] sm:$0xff]
    %v1895 = vld [vmem:[%s13 + $0x10] sm:$0xff]
    %v1896 = vld [vmem:[%s13 + $0x18] sm:$0x3f]
    %1898 = vset.pattern.permute.xlu0 0
    %1899 = vperm.xlu0 %1898, %v1893
    %v1900 = vpop.permute.xlu0 %1899
    %1903 = vset.pattern.permute.xlu0 0
    %1904 = vperm.xlu0 %1903, %v1894
    %v1905 = vpop.permute.xlu0 %1904
    %1908 = vset.pattern.permute.xlu0 0
    %1909 = vperm.xlu0 %1908, %v1895
    %v1910 = vpop.permute.xlu0 %1909
    %1913 = vset.pattern.permute.xlu0 0
    %1914 = vperm.xlu0 %1913, %v1896
    %v1915 = vpop.permute.xlu0 %1914
    %v1917 = vmul.f32 %v1889, %v1900
    %v1918 = vmul.f32 %v1890, %v1905
    %v1919 = vmul.f32 %v1891, %v1910
    %v1920 = vmul.f32 %v1892, %v1915
    %v1921 = vadd.f32 %v1917, %v1918
    %v1922 = vadd.f32 %v1921, %v1919
    %vm1923 = vcmask 1045504
    %v1924 = vsel %vm1923, %v1920, 0.0
    %v1925 = vadd.f32 %v1922, %v1924
    %v1926 = vrot.slane %v1925, 4
    %v1927 = vadd.f32 %v1925, %v1926
    %v1928 = vrot.slane %v1927, 2
    %v1929 = vadd.f32 %v1927, %v1928
    %v1930 = vrot.slane %v1929, 1
    %v1931 = vadd.f32 %v1929, %v1930
    %v1932 = vld [vmem:[#allocation2] sm:$0x1]
    %1934 = vset.pattern.permute.xlu0 0
    %1935 = vperm.xlu0 %1934, %v1932
    %v1936 = vpop.permute.xlu0 %1935
    %v1938 = vlaneseq
    %v1939 = vshrl.u32 %v1938, 7
    %v1940 = vsub.s32 0, %v1939
    %v1941 = vrot.slane %v1936, %v1940
    %v1942 = vadd.f32 %v1931, %v1941
    %1943 = vst [vmem:[#allocation3] sm:$0x1] %v1942
    // Predicated region
    $region62: #{tpu_custom_call.1} parent=1 // pred_check
      _
    $region63: #{tpu_custom_call.1} parent=1 // pred_check_branch
      %1945 = sbr.rel (0) target = $region65
    $region64: #{tpu_custom_call.1} parent=1 // pred_region
      %s1947 = ssub.s32 16, 16
      %1948 = vsyncadd [#allocation4], %s1947
      %s1950 = sshll.u32 [#allocation3], 4
      %s1951 = int_to_ptr.vmem [resolvable:$true] %s1950
      %1953 = dma.vmem_to_hbm [thread:$0]  %s1951, 16, %s15, [#allocation4]
    $region65: #{tpu_custom_call.1} parent=1 // pred_fallthru
      _
    // Predicated region
    $region66: #{tpu_custom_call.1} parent=1 // pred_check
      _
    $region67: #{tpu_custom_call.1} parent=1 // pred_check_branch
      %1955 = sbr.rel (0) target = $region69
    $region68: #{tpu_custom_call.1} parent=1 // pred_region
      %1956 = dma.done [#allocation4], 16
    $region69: #{tpu_custom_call.1} parent=1 // pred_fallthru
      _
    %1957 = vsyncpa [#allocation4], 1

</llo_original>
